<compile_context>
chip_gen: v7x
topology: tpu7x:2x2x1
jax: 0.10.0
libtpu: 0.0.40
codegen_flags: <defaults>
</compile_context>

<pallas_src>
import jax
import jax.numpy as jnp
from jax.experimental import pallas as pl
from jax.experimental.pallas import tpu as pltpu

WIDTH = 128  # self.width == self.embedding_dim == 128 in the PyTorch module


def _erf(x):
    # Abramowitz & Stegun 7.1.26 (max abs error 1.5e-7), f32 math.
    a1 = 0.254829592
    a2 = -0.284496736
    a3 = 1.421413741
    a4 = -1.453152027
    a5 = 1.061405429
    p = 0.3275911
    ax = jnp.abs(x)
    t = 1.0 / (1.0 + p * ax)
    poly = ((((a5 * t + a4) * t + a3) * t + a2) * t + a1) * t
    y = 1.0 - poly * jnp.exp(-ax * ax)
    return jnp.where(x >= 0.0, y, -y)


def _gelu(x):
    # exact (erf-based) GELU, matching torch.nn.GELU() default
    return 0.5 * x * (1.0 + _erf(x * 0.7071067811865475))


def _deepset_kernel(pfs_ref, mask_ref,
                    we1, be1, weR, beR,
                    wp, bp, wo, bo,
                    out_ref):
    f32 = jnp.float32
    bf16 = jnp.bfloat16
    TB, N, _ = mask_ref.shape
    W = we1.shape[1]

    # ---- nn_pf_embedding on all TB*N particles at once (M = TB*N rows) ----
    x = pfs_ref[...]                                                  # (TB*N, F) bf16
    h = _gelu(jnp.dot(x, we1[...], preferred_element_type=f32) + be1[...])
    for i in range(3):                                                # layers 2..4
        h = _gelu(jnp.dot(h.astype(bf16), weR[i],
                          preferred_element_type=f32) + beR[i])
    # (layer 4 inside ffn() is Linear only; the trailing GELU above is the
    #  module's act_obj applied to the embedding output in forward().)

    # ---- masked mean over the set axis (VPU multiply + XLU sublane sum) ----
    enc = h.reshape(TB, N, W)                                         # f32, tile-aligned
    m = mask_ref[...]                                                 # (TB, N, 1) f32
    summed = jnp.sum(enc * m, axis=1)                                 # (TB, W)
    num_pfs = jnp.sum(m, axis=1)                                      # (TB, 1)
    denom = jnp.maximum(num_pfs, 1.0)                                 # guard empty/padded jets
    jet = _gelu(summed / denom)                                       # (TB, W)

    # ---- nn_pred on the TB jets (M = TB rows) ----
    g = jet
    for i in range(3):
        g = _gelu(jnp.dot(g.astype(bf16), wp[i],
                          preferred_element_type=f32) + bp[i])
    out = jnp.dot(g.astype(bf16), wo[...], preferred_element_type=f32) + bo[...]
    out_ref[...] = out                                                # (TB, O_pad) lane-dense


def _const_spec(arr):
    zeros = (0,) * arr.ndim
    return pl.BlockSpec(arr.shape, lambda i, _z=zeros: _z)


def _choose_tile_b(B, N, F, O_pad, vmem_budget=24 * 1024 * 1024):
    """Pick jets-per-step so MXU rows are large but VMEM stays in budget."""
    f_lanes = max(128, -(-F // 128) * 128)
    # rough per-jet bytes: 2x bf16 input buffers + 2x f32 mask buffers
    # + ~4 live f32 (N, W) activations + 2x f32 output buffers
    per_jet = N * (2 * 2 * f_lanes + (2 * 4 + 4 * 4) * 128) + 2 * 4 * O_pad
    cap = max(8, vmem_budget // per_jet)
    tb = min(max(B, 1), cap, 512)
    return -(-tb // 8) * 8            # multiple of 8 (sublanes)


def deepset_forward(params, pfs_pad, pfs_mask, *, tile_b=None):
    f32 = jnp.float32
    bf16 = jnp.bfloat16
    B, N, F = pfs_pad.shape
    W = params["w1"].shape[1]
    O = params["v4"].shape[1]
    O_pad = -(-O // 128) * 128        # lane-dense output width (>= 128)

    if pfs_mask.ndim == 2:
        pfs_mask = pfs_mask[:, :, None]

    # --- pad the set axis to a multiple of 8 (padded particles get mask 0) ---
    N_pad = -(-N // 8) * 8
    pad_n = N_pad - N

    TB = tile_b if tile_b is not None else _choose_tile_b(B, N_pad, F, O_pad)
    grid = pl.cdiv(B, TB)
    B_pad = grid * TB
    pad_b = B_pad - B

    pfs_b = jnp.pad(pfs_pad.astype(bf16), ((0, pad_b), (0, pad_n), (0, 0)))
    mask_b = jnp.pad(pfs_mask.astype(f32), ((0, pad_b), (0, pad_n), (0, 0)))
    # Flatten particles in the wrapper so all in-kernel matmuls are 2-D and the
    # only in-kernel reshape is f32 tile-aligned.
    pfs_flat = pfs_b.reshape(B_pad * N_pad, F)

    # --- weights: bf16 matrices (stacked where same-shape), f32 biases ---
    we1 = params["w1"].astype(bf16)                                           # (F, W)
    be1 = params["b1"].astype(f32)                                            # (1, W)
    weR = jnp.stack([params["w2"], params["w3"], params["w4"]]).astype(bf16)  # (3, W, W)
    beR = jnp.stack([params["b2"], params["b3"], params["b4"]]).astype(f32)   # (3, 1, W)
    wp = jnp.stack([params["v1"], params["v2"], params["v3"]]).astype(bf16)   # (3, W, W)
    bp = jnp.stack([params["c1"], params["c2"], params["c3"]]).astype(f32)    # (3, 1, W)
    wo = jnp.zeros((W, O_pad), f32).at[:, :O].set(params["v4"]).astype(bf16)  # (W, O_pad)
    bo = jnp.zeros((1, O_pad), f32).at[:, :O].set(params["c4"])               # (1, O_pad)

    weight_args = (we1, be1, weR, beR, wp, bp, wo, bo)
    weight_specs = [_const_spec(a) for a in weight_args]

    out = pl.pallas_call(
        _deepset_kernel,
        out_shape=jax.ShapeDtypeStruct((B_pad, O_pad), f32),
        grid_spec=pltpu.PrefetchScalarGridSpec(
            num_scalar_prefetch=0,
            grid=(grid,),
            in_specs=[pl.BlockSpec((TB * N_pad, F), lambda i: (i, 0)),
                      pl.BlockSpec((TB, N_pad, 1), lambda i: (i, 0, 0))]
                     + weight_specs,
            out_specs=pl.BlockSpec((TB, O_pad), lambda i: (i, 0)),
        ),
        compiler_params=pltpu.CompilerParams(
            dimension_semantics=("parallel",),
            vmem_limit_bytes=32 * 1024 * 1024),
    )(pfs_flat, mask_b, *weight_args)
    return out[:B, :O]


def init_params(key, num_inputs, num_outputs, width=WIDTH):
    # Deterministic synthetic init (PyTorch-Linear-style uniform bounds).
    # Weights stored as (fan_in, fan_out) == torch_weight.T, biases as (1, fan_out).
    keys = jax.random.split(key, 16)

    def lin(kw, kb, fan_in, fan_out):
        bound = float(1.0 / (fan_in ** 0.5))
        w = jax.random.uniform(kw, (fan_in, fan_out), jnp.float32, -bound, bound)
        b = jax.random.uniform(kb, (1, fan_out), jnp.float32, -bound, bound)
        return w, b

    p = {}
    p["w1"], p["b1"] = lin(keys[0], keys[1], num_inputs, width)
    p["w2"], p["b2"] = lin(keys[2], keys[3], width, width)
    p["w3"], p["b3"] = lin(keys[4], keys[5], width, width)
    p["w4"], p["b4"] = lin(keys[6], keys[7], width, width)   # embedding_dim == width
    p["v1"], p["c1"] = lin(keys[8], keys[9], width, width)
    p["v2"], p["c2"] = lin(keys[10], keys[11], width, width)
    p["v3"], p["c3"] = lin(keys[12], keys[13], width, width)
    p["v4"], p["c4"] = lin(keys[14], keys[15], width, num_outputs)
    return p


def deepset_reference(params, pfs_pad, pfs_mask, matmul_dtype=jnp.float32):
    # Pure-JAX reference mirroring the PyTorch forward (eval mode).
    # matmul_dtype=float32   -> faithful f32 PyTorch semantics.
    # matmul_dtype=bfloat16  -> mirrors the kernel's bf16-matmul / f32-accumulate numerics.
    f32 = jnp.float32

    def linear(x, w, b):
        return jnp.dot(x.astype(matmul_dtype), w.astype(matmul_dtype),
                       preferred_element_type=f32) + b

    def gelu(x):
        return jax.nn.gelu(x.astype(f32), approximate=False)   # exact erf GELU

    def ffn_apply(x, ws):
        for idx, (w, b) in enumerate(ws):
            x = linear(x, w, b)
            if idx < len(ws) - 1:
                x = gelu(x)
        return x

    emb = [(params["w1"], params["b1"]), (params["w2"], params["b2"]),
           (params["w3"], params["b3"]), (params["w4"], params["b4"])]
    pred = [(params["v1"], params["c1"]), (params["v2"], params["c2"]),
            (params["v3"], params["c3"]), (params["v4"], params["c4"])]

    mask = pfs_mask.astype(f32)
    pf_enc = gelu(ffn_apply(pfs_pad.astype(f32), emb)) * mask   # (B, N, W)
    num_pfs = jnp.sum(mask, axis=1)                             # (B, 1)
    jet = gelu(jnp.sum(pf_enc, axis=1) / num_pfs)               # (B, W)
    return ffn_apply(jet, pred)                                 # (B, O)


if __name__ == "__main__":
    key = jax.random.PRNGKey(0)
    B, N, F, O = 2, 8, 16, 8        # batch, set size, num_inputs, num_outputs

    kp, kx = jax.random.split(key)
    params = init_params(kp, F, O)
    pfs_pad = jax.random.normal(kx, (B, N, F), jnp.float32)
    lens = jnp.array([5, 8], dtype=jnp.int32)
    pfs_mask = (jnp.arange(N)[None, :, None] < lens[:, None, None]).astype(jnp.float32)  # (B, N, 1)

    out = deepset_forward(params, pfs_pad, pfs_mask)
    out = jax.block_until_ready(out)
    assert out.shape == (B, O)
    assert bool(jnp.all(jnp.isfinite(out)))

    # Tight check against a reference that mirrors the kernel's bf16-matmul /
    # f32-accumulate numerics (verifies the kernel implementation precisely).
    ref_bf16 = deepset_reference(params, pfs_pad, pfs_mask, matmul_dtype=jnp.bfloat16)
    assert jnp.allclose(out, ref_bf16, atol=2e-3, rtol=2e-3), (out, ref_bf16)

    # Looser check against the faithful f32 PyTorch-eval semantics
    # (bounds the bf16-matmul quantization error end-to-end).
    ref_f32 = deepset_reference(params, pfs_pad, pfs_mask, matmul_dtype=jnp.float32)
    assert jnp.allclose(out, ref_f32, atol=5e-2, rtol=5e-2), (out, ref_f32)

    print("KERNEL_OK")
</pallas_src>

<mosaic_0001>
module attributes {stable_mosaic.version = 11 : i64} {
  func.func @_deepset_kernel(%arg0: i32, %arg1: memref<64x16xbf16, #tpu.memory_space<vmem>>, %arg2: memref<8x8x1xf32, #tpu.memory_space<vmem>>, %arg3: memref<16x128xbf16, #tpu.memory_space<vmem>>, %arg4: memref<1x128xf32, #tpu.memory_space<vmem>>, %arg5: memref<3x128x128xbf16, #tpu.memory_space<vmem>>, %arg6: memref<3x1x128xf32, #tpu.memory_space<vmem>>, %arg7: memref<3x128x128xbf16, #tpu.memory_space<vmem>>, %arg8: memref<3x1x128xf32, #tpu.memory_space<vmem>>, %arg9: memref<128x128xbf16, #tpu.memory_space<vmem>>, %arg10: memref<1x128xf32, #tpu.memory_space<vmem>>, %arg11: memref<8x128xf32, #tpu.memory_space<vmem>>) attributes {dimension_semantics = [#tpu.dimension_semantics<parallel>], iteration_bounds = array<i64: 1>, scalar_prefetch = 0 : i64, scratch_operands = 0 : i64, tpu.core_type = #tpu.core_type<tc>, window_params = [{transform_indices = @transform_0, window_bounds = array<i64: 64, 16>}, {transform_indices = @transform_1, window_bounds = array<i64: 8, 8, 1>}, {pipeline_mode = #tpu.pipeline_mode<synchronous>, transform_indices = @transform_2, window_bounds = array<i64: 16, 128>}, {pipeline_mode = #tpu.pipeline_mode<synchronous>, transform_indices = @transform_3, window_bounds = array<i64: 1, 128>}, {pipeline_mode = #tpu.pipeline_mode<synchronous>, transform_indices = @transform_4, window_bounds = array<i64: 3, 128, 128>}, {pipeline_mode = #tpu.pipeline_mode<synchronous>, transform_indices = @transform_5, window_bounds = array<i64: 3, 1, 128>}, {pipeline_mode = #tpu.pipeline_mode<synchronous>, transform_indices = @transform_6, window_bounds = array<i64: 3, 128, 128>}, {pipeline_mode = #tpu.pipeline_mode<synchronous>, transform_indices = @transform_7, window_bounds = array<i64: 3, 1, 128>}, {pipeline_mode = #tpu.pipeline_mode<synchronous>, transform_indices = @transform_8, window_bounds = array<i64: 128, 128>}, {pipeline_mode = #tpu.pipeline_mode<synchronous>, transform_indices = @transform_9, window_bounds = array<i64: 1, 128>}, {transform_indices = @transform_10, window_bounds = array<i64: 8, 128>}]} {
    %c0 = arith.constant 0 : index
    %c0_0 = arith.constant 0 : index
    %0 = vector.load %arg1[%c0, %c0_0] : memref<64x16xbf16, #tpu.memory_space<vmem>>, vector<64x16xbf16>
    %c0_1 = arith.constant 0 : index
    %c0_2 = arith.constant 0 : index
    %1 = vector.load %arg3[%c0_1, %c0_2] : memref<16x128xbf16, #tpu.memory_space<vmem>>, vector<16x128xbf16>
    %cst = arith.constant dense<0.000000e+00> : vector<64x128xf32>
    %2 = tpu.matmul %0, %1, %cst {dimension_numbers = #tpu.dot_dimension_numbers<[1], [0], [0], [1], [0, 0, 1, 1], [], []>} : vector<64x16xbf16>, vector<16x128xbf16>, vector<64x128xf32> -> vector<64x128xf32>
    %c0_3 = arith.constant 0 : index
    %c0_4 = arith.constant 0 : index
    %3 = vector.load %arg4[%c0_3, %c0_4] : memref<1x128xf32, #tpu.memory_space<vmem>>, vector<1x128xf32>
    %4 = vector.broadcast %3 : vector<1x128xf32> to vector<64x128xf32>
    %5 = arith.addf %2, %4 : vector<64x128xf32>
    %cst_5 = arith.constant 5.000000e-01 : f32
    %6 = vector.broadcast %cst_5 : f32 to vector<64x128xf32>
    %7 = arith.mulf %6, %5 : vector<64x128xf32>
    %cst_6 = arith.constant 0.707106769 : f32
    %8 = vector.broadcast %cst_6 : f32 to vector<64x128xf32>
    %9 = arith.mulf %5, %8 : vector<64x128xf32>
    %10 = math.absf %9 : vector<64x128xf32>
    %cst_7 = arith.constant 0.327591091 : f32
    %11 = vector.broadcast %cst_7 : f32 to vector<64x128xf32>
    %12 = arith.mulf %11, %10 : vector<64x128xf32>
    %cst_8 = arith.constant 1.000000e+00 : f32
    %13 = vector.broadcast %cst_8 : f32 to vector<64x128xf32>
    %14 = arith.addf %13, %12 : vector<64x128xf32>
    %cst_9 = arith.constant 1.000000e+00 : f32
    %15 = vector.broadcast %cst_9 : f32 to vector<64x128xf32>
    %16 = arith.divf %15, %14 : vector<64x128xf32>
    %cst_10 = arith.constant 1.06140542 : f32
    %17 = vector.broadcast %cst_10 : f32 to vector<64x128xf32>
    %18 = arith.mulf %17, %16 : vector<64x128xf32>
    %cst_11 = arith.constant -1.45315206 : f32
    %19 = vector.broadcast %cst_11 : f32 to vector<64x128xf32>
    %20 = arith.addf %18, %19 : vector<64x128xf32>
    %21 = arith.mulf %20, %16 : vector<64x128xf32>
    %cst_12 = arith.constant 1.42141378 : f32
    %22 = vector.broadcast %cst_12 : f32 to vector<64x128xf32>
    %23 = arith.addf %21, %22 : vector<64x128xf32>
    %24 = arith.mulf %23, %16 : vector<64x128xf32>
    %cst_13 = arith.constant -0.284496725 : f32
    %25 = vector.broadcast %cst_13 : f32 to vector<64x128xf32>
    %26 = arith.addf %24, %25 : vector<64x128xf32>
    %27 = arith.mulf %26, %16 : vector<64x128xf32>
    %cst_14 = arith.constant 0.254829586 : f32
    %28 = vector.broadcast %cst_14 : f32 to vector<64x128xf32>
    %29 = arith.addf %27, %28 : vector<64x128xf32>
    %30 = arith.mulf %29, %16 : vector<64x128xf32>
    %cst_15 = arith.constant 0.000000e+00 : f32
    %31 = vector.broadcast %cst_15 : f32 to vector<64x128xf32>
    %32 = arith.subf %31, %10 : vector<64x128xf32>
    %33 = arith.mulf %32, %10 : vector<64x128xf32>
    %34 = math.exp %33 : vector<64x128xf32>
    %35 = arith.mulf %30, %34 : vector<64x128xf32>
    %cst_16 = arith.constant 1.000000e+00 : f32
    %36 = vector.broadcast %cst_16 : f32 to vector<64x128xf32>
    %37 = arith.subf %36, %35 : vector<64x128xf32>
    %cst_17 = arith.constant 0.000000e+00 : f32
    %38 = vector.broadcast %cst_17 : f32 to vector<64x128xf32>
    %39 = arith.cmpf oge, %9, %38 : vector<64x128xf32>
    %cst_18 = arith.constant 0.000000e+00 : f32
    %40 = vector.broadcast %cst_18 : f32 to vector<64x128xf32>
    %41 = arith.subf %40, %37 : vector<64x128xf32>
    %42 = arith.select %39, %37, %41 : vector<64x128xi1>, vector<64x128xf32>
    %cst_19 = arith.constant 1.000000e+00 : f32
    %43 = vector.broadcast %cst_19 : f32 to vector<64x128xf32>
    %44 = arith.addf %43, %42 : vector<64x128xf32>
    %45 = arith.mulf %7, %44 : vector<64x128xf32>
    %46 = arith.truncf %45 : vector<64x128xf32> to vector<64x128xbf16>
    %c0_20 = arith.constant 0 : index
    %c0_21 = arith.constant 0 : index
    %c0_22 = arith.constant 0 : index
    %47 = vector.load %arg5[%c0_20, %c0_21, %c0_22] : memref<3x128x128xbf16, #tpu.memory_space<vmem>>, vector<1x128x128xbf16>
    %48 = vector.shape_cast %47 : vector<1x128x128xbf16> to vector<128x128xbf16>
    %cst_23 = arith.constant dense<0.000000e+00> : vector<64x128xf32>
    %49 = tpu.matmul %46, %48, %cst_23 {dimension_numbers = #tpu.dot_dimension_numbers<[1], [0], [0], [1], [0, 0, 1, 1], [], []>} : vector<64x128xbf16>, vector<128x128xbf16>, vector<64x128xf32> -> vector<64x128xf32>
    %c0_24 = arith.constant 0 : index
    %c0_25 = arith.constant 0 : index
    %c0_26 = arith.constant 0 : index
    %50 = vector.load %arg6[%c0_24, %c0_25, %c0_26] : memref<3x1x128xf32, #tpu.memory_space<vmem>>, vector<1x1x128xf32>
    %51 = vector.shape_cast %50 : vector<1x1x128xf32> to vector<1x128xf32>
    %52 = vector.broadcast %51 : vector<1x128xf32> to vector<64x128xf32>
    %53 = arith.addf %49, %52 : vector<64x128xf32>
    %cst_27 = arith.constant 5.000000e-01 : f32
    %54 = vector.broadcast %cst_27 : f32 to vector<64x128xf32>
    %55 = arith.mulf %54, %53 : vector<64x128xf32>
    %cst_28 = arith.constant 0.707106769 : f32
    %56 = vector.broadcast %cst_28 : f32 to vector<64x128xf32>
    %57 = arith.mulf %53, %56 : vector<64x128xf32>
    %58 = math.absf %57 : vector<64x128xf32>
    %cst_29 = arith.constant 0.327591091 : f32
    %59 = vector.broadcast %cst_29 : f32 to vector<64x128xf32>
    %60 = arith.mulf %59, %58 : vector<64x128xf32>
    %cst_30 = arith.constant 1.000000e+00 : f32
    %61 = vector.broadcast %cst_30 : f32 to vector<64x128xf32>
    %62 = arith.addf %61, %60 : vector<64x128xf32>
    %cst_31 = arith.constant 1.000000e+00 : f32
    %63 = vector.broadcast %cst_31 : f32 to vector<64x128xf32>
    %64 = arith.divf %63, %62 : vector<64x128xf32>
    %cst_32 = arith.constant 1.06140542 : f32
    %65 = vector.broadcast %cst_32 : f32 to vector<64x128xf32>
    %66 = arith.mulf %65, %64 : vector<64x128xf32>
    %cst_33 = arith.constant -1.45315206 : f32
    %67 = vector.broadcast %cst_33 : f32 to vector<64x128xf32>
    %68 = arith.addf %66, %67 : vector<64x128xf32>
    %69 = arith.mulf %68, %64 : vector<64x128xf32>
    %cst_34 = arith.constant 1.42141378 : f32
    %70 = vector.broadcast %cst_34 : f32 to vector<64x128xf32>
    %71 = arith.addf %69, %70 : vector<64x128xf32>
    %72 = arith.mulf %71, %64 : vector<64x128xf32>
    %cst_35 = arith.constant -0.284496725 : f32
    %73 = vector.broadcast %cst_35 : f32 to vector<64x128xf32>
    %74 = arith.addf %72, %73 : vector<64x128xf32>
    %75 = arith.mulf %74, %64 : vector<64x128xf32>
    %cst_36 = arith.constant 0.254829586 : f32
    %76 = vector.broadcast %cst_36 : f32 to vector<64x128xf32>
    %77 = arith.addf %75, %76 : vector<64x128xf32>
    %78 = arith.mulf %77, %64 : vector<64x128xf32>
    %cst_37 = arith.constant 0.000000e+00 : f32
    %79 = vector.broadcast %cst_37 : f32 to vector<64x128xf32>
    %80 = arith.subf %79, %58 : vector<64x128xf32>
    %81 = arith.mulf %80, %58 : vector<64x128xf32>
    %82 = math.exp %81 : vector<64x128xf32>
    %83 = arith.mulf %78, %82 : vector<64x128xf32>
    %cst_38 = arith.constant 1.000000e+00 : f32
    %84 = vector.broadcast %cst_38 : f32 to vector<64x128xf32>
    %85 = arith.subf %84, %83 : vector<64x128xf32>
    %cst_39 = arith.constant 0.000000e+00 : f32
    %86 = vector.broadcast %cst_39 : f32 to vector<64x128xf32>
    %87 = arith.cmpf oge, %57, %86 : vector<64x128xf32>
    %cst_40 = arith.constant 0.000000e+00 : f32
    %88 = vector.broadcast %cst_40 : f32 to vector<64x128xf32>
    %89 = arith.subf %88, %85 : vector<64x128xf32>
    %90 = arith.select %87, %85, %89 : vector<64x128xi1>, vector<64x128xf32>
    %cst_41 = arith.constant 1.000000e+00 : f32
    %91 = vector.broadcast %cst_41 : f32 to vector<64x128xf32>
    %92 = arith.addf %91, %90 : vector<64x128xf32>
    %93 = arith.mulf %55, %92 : vector<64x128xf32>
    %94 = arith.truncf %93 : vector<64x128xf32> to vector<64x128xbf16>
    %c1 = arith.constant 1 : index
    %c0_42 = arith.constant 0 : index
    %c0_43 = arith.constant 0 : index
    %95 = vector.load %arg5[%c1, %c0_42, %c0_43] : memref<3x128x128xbf16, #tpu.memory_space<vmem>>, vector<1x128x128xbf16>
    %96 = vector.shape_cast %95 : vector<1x128x128xbf16> to vector<128x128xbf16>
    %cst_44 = arith.constant dense<0.000000e+00> : vector<64x128xf32>
    %97 = tpu.matmul %94, %96, %cst_44 {dimension_numbers = #tpu.dot_dimension_numbers<[1], [0], [0], [1], [0, 0, 1, 1], [], []>} : vector<64x128xbf16>, vector<128x128xbf16>, vector<64x128xf32> -> vector<64x128xf32>
    %c1_45 = arith.constant 1 : index
    %c0_46 = arith.constant 0 : index
    %c0_47 = arith.constant 0 : index
    %98 = vector.load %arg6[%c1_45, %c0_46, %c0_47] : memref<3x1x128xf32, #tpu.memory_space<vmem>>, vector<1x1x128xf32>
    %99 = vector.shape_cast %98 : vector<1x1x128xf32> to vector<1x128xf32>
    %100 = vector.broadcast %99 : vector<1x128xf32> to vector<64x128xf32>
    %101 = arith.addf %97, %100 : vector<64x128xf32>
    %cst_48 = arith.constant 5.000000e-01 : f32
    %102 = vector.broadcast %cst_48 : f32 to vector<64x128xf32>
    %103 = arith.mulf %102, %101 : vector<64x128xf32>
    %cst_49 = arith.constant 0.707106769 : f32
    %104 = vector.broadcast %cst_49 : f32 to vector<64x128xf32>
    %105 = arith.mulf %101, %104 : vector<64x128xf32>
    %106 = math.absf %105 : vector<64x128xf32>
    %cst_50 = arith.constant 0.327591091 : f32
    %107 = vector.broadcast %cst_50 : f32 to vector<64x128xf32>
    %108 = arith.mulf %107, %106 : vector<64x128xf32>
    %cst_51 = arith.constant 1.000000e+00 : f32
    %109 = vector.broadcast %cst_51 : f32 to vector<64x128xf32>
    %110 = arith.addf %109, %108 : vector<64x128xf32>
    %cst_52 = arith.constant 1.000000e+00 : f32
    %111 = vector.broadcast %cst_52 : f32 to vector<64x128xf32>
    %112 = arith.divf %111, %110 : vector<64x128xf32>
    %cst_53 = arith.constant 1.06140542 : f32
    %113 = vector.broadcast %cst_53 : f32 to vector<64x128xf32>
    %114 = arith.mulf %113, %112 : vector<64x128xf32>
    %cst_54 = arith.constant -1.45315206 : f32
    %115 = vector.broadcast %cst_54 : f32 to vector<64x128xf32>
    %116 = arith.addf %114, %115 : vector<64x128xf32>
    %117 = arith.mulf %116, %112 : vector<64x128xf32>
    %cst_55 = arith.constant 1.42141378 : f32
    %118 = vector.broadcast %cst_55 : f32 to vector<64x128xf32>
    %119 = arith.addf %117, %118 : vector<64x128xf32>
    %120 = arith.mulf %119, %112 : vector<64x128xf32>
    %cst_56 = arith.constant -0.284496725 : f32
    %121 = vector.broadcast %cst_56 : f32 to vector<64x128xf32>
    %122 = arith.addf %120, %121 : vector<64x128xf32>
    %123 = arith.mulf %122, %112 : vector<64x128xf32>
    %cst_57 = arith.constant 0.254829586 : f32
    %124 = vector.broadcast %cst_57 : f32 to vector<64x128xf32>
    %125 = arith.addf %123, %124 : vector<64x128xf32>
    %126 = arith.mulf %125, %112 : vector<64x128xf32>
    %cst_58 = arith.constant 0.000000e+00 : f32
    %127 = vector.broadcast %cst_58 : f32 to vector<64x128xf32>
    %128 = arith.subf %127, %106 : vector<64x128xf32>
    %129 = arith.mulf %128, %106 : vector<64x128xf32>
    %130 = math.exp %129 : vector<64x128xf32>
    %131 = arith.mulf %126, %130 : vector<64x128xf32>
    %cst_59 = arith.constant 1.000000e+00 : f32
    %132 = vector.broadcast %cst_59 : f32 to vector<64x128xf32>
    %133 = arith.subf %132, %131 : vector<64x128xf32>
    %cst_60 = arith.constant 0.000000e+00 : f32
    %134 = vector.broadcast %cst_60 : f32 to vector<64x128xf32>
    %135 = arith.cmpf oge, %105, %134 : vector<64x128xf32>
    %cst_61 = arith.constant 0.000000e+00 : f32
    %136 = vector.broadcast %cst_61 : f32 to vector<64x128xf32>
    %137 = arith.subf %136, %133 : vector<64x128xf32>
    %138 = arith.select %135, %133, %137 : vector<64x128xi1>, vector<64x128xf32>
    %cst_62 = arith.constant 1.000000e+00 : f32
    %139 = vector.broadcast %cst_62 : f32 to vector<64x128xf32>
    %140 = arith.addf %139, %138 : vector<64x128xf32>
    %141 = arith.mulf %103, %140 : vector<64x128xf32>
    %142 = arith.truncf %141 : vector<64x128xf32> to vector<64x128xbf16>
    %c2 = arith.constant 2 : index
    %c0_63 = arith.constant 0 : index
    %c0_64 = arith.constant 0 : index
    %143 = vector.load %arg5[%c2, %c0_63, %c0_64] : memref<3x128x128xbf16, #tpu.memory_space<vmem>>, vector<1x128x128xbf16>
    %144 = vector.shape_cast %143 : vector<1x128x128xbf16> to vector<128x128xbf16>
    %cst_65 = arith.constant dense<0.000000e+00> : vector<64x128xf32>
    %145 = tpu.matmul %142, %144, %cst_65 {dimension_numbers = #tpu.dot_dimension_numbers<[1], [0], [0], [1], [0, 0, 1, 1], [], []>} : vector<64x128xbf16>, vector<128x128xbf16>, vector<64x128xf32> -> vector<64x128xf32>
    %c2_66 = arith.constant 2 : index
    %c0_67 = arith.constant 0 : index
    %c0_68 = arith.constant 0 : index
    %146 = vector.load %arg6[%c2_66, %c0_67, %c0_68] : memref<3x1x128xf32, #tpu.memory_space<vmem>>, vector<1x1x128xf32>
    %147 = vector.shape_cast %146 : vector<1x1x128xf32> to vector<1x128xf32>
    %148 = vector.broadcast %147 : vector<1x128xf32> to vector<64x128xf32>
    %149 = arith.addf %145, %148 : vector<64x128xf32>
    %cst_69 = arith.constant 5.000000e-01 : f32
    %150 = vector.broadcast %cst_69 : f32 to vector<64x128xf32>
    %151 = arith.mulf %150, %149 : vector<64x128xf32>
    %cst_70 = arith.constant 0.707106769 : f32
    %152 = vector.broadcast %cst_70 : f32 to vector<64x128xf32>
    %153 = arith.mulf %149, %152 : vector<64x128xf32>
    %154 = math.absf %153 : vector<64x128xf32>
    %cst_71 = arith.constant 0.327591091 : f32
    %155 = vector.broadcast %cst_71 : f32 to vector<64x128xf32>
    %156 = arith.mulf %155, %154 : vector<64x128xf32>
    %cst_72 = arith.constant 1.000000e+00 : f32
    %157 = vector.broadcast %cst_72 : f32 to vector<64x128xf32>
    %158 = arith.addf %157, %156 : vector<64x128xf32>
    %cst_73 = arith.constant 1.000000e+00 : f32
    %159 = vector.broadcast %cst_73 : f32 to vector<64x128xf32>
    %160 = arith.divf %159, %158 : vector<64x128xf32>
    %cst_74 = arith.constant 1.06140542 : f32
    %161 = vector.broadcast %cst_74 : f32 to vector<64x128xf32>
    %162 = arith.mulf %161, %160 : vector<64x128xf32>
    %cst_75 = arith.constant -1.45315206 : f32
    %163 = vector.broadcast %cst_75 : f32 to vector<64x128xf32>
    %164 = arith.addf %162, %163 : vector<64x128xf32>
    %165 = arith.mulf %164, %160 : vector<64x128xf32>
    %cst_76 = arith.constant 1.42141378 : f32
    %166 = vector.broadcast %cst_76 : f32 to vector<64x128xf32>
    %167 = arith.addf %165, %166 : vector<64x128xf32>
    %168 = arith.mulf %167, %160 : vector<64x128xf32>
    %cst_77 = arith.constant -0.284496725 : f32
    %169 = vector.broadcast %cst_77 : f32 to vector<64x128xf32>
    %170 = arith.addf %168, %169 : vector<64x128xf32>
    %171 = arith.mulf %170, %160 : vector<64x128xf32>
    %cst_78 = arith.constant 0.254829586 : f32
    %172 = vector.broadcast %cst_78 : f32 to vector<64x128xf32>
    %173 = arith.addf %171, %172 : vector<64x128xf32>
    %174 = arith.mulf %173, %160 : vector<64x128xf32>
    %cst_79 = arith.constant 0.000000e+00 : f32
    %175 = vector.broadcast %cst_79 : f32 to vector<64x128xf32>
    %176 = arith.subf %175, %154 : vector<64x128xf32>
    %177 = arith.mulf %176, %154 : vector<64x128xf32>
    %178 = math.exp %177 : vector<64x128xf32>
    %179 = arith.mulf %174, %178 : vector<64x128xf32>
    %cst_80 = arith.constant 1.000000e+00 : f32
    %180 = vector.broadcast %cst_80 : f32 to vector<64x128xf32>
    %181 = arith.subf %180, %179 : vector<64x128xf32>
    %cst_81 = arith.constant 0.000000e+00 : f32
    %182 = vector.broadcast %cst_81 : f32 to vector<64x128xf32>
    %183 = arith.cmpf oge, %153, %182 : vector<64x128xf32>
    %cst_82 = arith.constant 0.000000e+00 : f32
    %184 = vector.broadcast %cst_82 : f32 to vector<64x128xf32>
    %185 = arith.subf %184, %181 : vector<64x128xf32>
    %186 = arith.select %183, %181, %185 : vector<64x128xi1>, vector<64x128xf32>
    %cst_83 = arith.constant 1.000000e+00 : f32
    %187 = vector.broadcast %cst_83 : f32 to vector<64x128xf32>
    %188 = arith.addf %187, %186 : vector<64x128xf32>
    %189 = arith.mulf %151, %188 : vector<64x128xf32>
    %190 = vector.shape_cast %189 : vector<64x128xf32> to vector<8x8x128xf32>
    %c0_84 = arith.constant 0 : index
    %c0_85 = arith.constant 0 : index
    %c0_86 = arith.constant 0 : index
    %191 = vector.load %arg2[%c0_84, %c0_85, %c0_86] : memref<8x8x1xf32, #tpu.memory_space<vmem>>, vector<8x8x1xf32>
    %192 = vector.broadcast %191 : vector<8x8x1xf32> to vector<8x8x128xf32>
    %193 = arith.mulf %190, %192 : vector<8x8x128xf32>
    %cst_87 = arith.constant dense<0.000000e+00> : vector<8x128xf32>
    %194 = vector.multi_reduction <add>, %193, %cst_87 [1] : vector<8x8x128xf32> to vector<8x128xf32>
    %cst_88 = arith.constant dense<0.000000e+00> : vector<8x1xf32>
    %195 = vector.multi_reduction <add>, %191, %cst_88 [1] : vector<8x8x1xf32> to vector<8x1xf32>
    %cst_89 = arith.constant 1.000000e+00 : f32
    %196 = vector.broadcast %cst_89 : f32 to vector<8x1xf32>
    %197 = arith.maximumf %195, %196 : vector<8x1xf32>
    %198 = vector.broadcast %197 : vector<8x1xf32> to vector<8x128xf32>
    %199 = arith.divf %194, %198 : vector<8x128xf32>
    %cst_90 = arith.constant 5.000000e-01 : f32
    %200 = vector.broadcast %cst_90 : f32 to vector<8x128xf32>
    %201 = arith.mulf %200, %199 : vector<8x128xf32>
    %cst_91 = arith.constant 0.707106769 : f32
    %202 = vector.broadcast %cst_91 : f32 to vector<8x128xf32>
    %203 = arith.mulf %199, %202 : vector<8x128xf32>
    %204 = math.absf %203 : vector<8x128xf32>
    %cst_92 = arith.constant 0.327591091 : f32
    %205 = vector.broadcast %cst_92 : f32 to vector<8x128xf32>
    %206 = arith.mulf %205, %204 : vector<8x128xf32>
    %cst_93 = arith.constant 1.000000e+00 : f32
    %207 = vector.broadcast %cst_93 : f32 to vector<8x128xf32>
    %208 = arith.addf %207, %206 : vector<8x128xf32>
    %cst_94 = arith.constant 1.000000e+00 : f32
    %209 = vector.broadcast %cst_94 : f32 to vector<8x128xf32>
    %210 = arith.divf %209, %208 : vector<8x128xf32>
    %cst_95 = arith.constant 1.06140542 : f32
    %211 = vector.broadcast %cst_95 : f32 to vector<8x128xf32>
    %212 = arith.mulf %211, %210 : vector<8x128xf32>
    %cst_96 = arith.constant -1.45315206 : f32
    %213 = vector.broadcast %cst_96 : f32 to vector<8x128xf32>
    %214 = arith.addf %212, %213 : vector<8x128xf32>
    %215 = arith.mulf %214, %210 : vector<8x128xf32>
    %cst_97 = arith.constant 1.42141378 : f32
    %216 = vector.broadcast %cst_97 : f32 to vector<8x128xf32>
    %217 = arith.addf %215, %216 : vector<8x128xf32>
    %218 = arith.mulf %217, %210 : vector<8x128xf32>
    %cst_98 = arith.constant -0.284496725 : f32
    %219 = vector.broadcast %cst_98 : f32 to vector<8x128xf32>
    %220 = arith.addf %218, %219 : vector<8x128xf32>
    %221 = arith.mulf %220, %210 : vector<8x128xf32>
    %cst_99 = arith.constant 0.254829586 : f32
    %222 = vector.broadcast %cst_99 : f32 to vector<8x128xf32>
    %223 = arith.addf %221, %222 : vector<8x128xf32>
    %224 = arith.mulf %223, %210 : vector<8x128xf32>
    %cst_100 = arith.constant 0.000000e+00 : f32
    %225 = vector.broadcast %cst_100 : f32 to vector<8x128xf32>
    %226 = arith.subf %225, %204 : vector<8x128xf32>
    %227 = arith.mulf %226, %204 : vector<8x128xf32>
    %228 = math.exp %227 : vector<8x128xf32>
    %229 = arith.mulf %224, %228 : vector<8x128xf32>
    %cst_101 = arith.constant 1.000000e+00 : f32
    %230 = vector.broadcast %cst_101 : f32 to vector<8x128xf32>
    %231 = arith.subf %230, %229 : vector<8x128xf32>
    %cst_102 = arith.constant 0.000000e+00 : f32
    %232 = vector.broadcast %cst_102 : f32 to vector<8x128xf32>
    %233 = arith.cmpf oge, %203, %232 : vector<8x128xf32>
    %cst_103 = arith.constant 0.000000e+00 : f32
    %234 = vector.broadcast %cst_103 : f32 to vector<8x128xf32>
    %235 = arith.subf %234, %231 : vector<8x128xf32>
    %236 = arith.select %233, %231, %235 : vector<8x128xi1>, vector<8x128xf32>
    %cst_104 = arith.constant 1.000000e+00 : f32
    %237 = vector.broadcast %cst_104 : f32 to vector<8x128xf32>
    %238 = arith.addf %237, %236 : vector<8x128xf32>
    %239 = arith.mulf %201, %238 : vector<8x128xf32>
    %240 = arith.truncf %239 : vector<8x128xf32> to vector<8x128xbf16>
    %c0_105 = arith.constant 0 : index
    %c0_106 = arith.constant 0 : index
    %c0_107 = arith.constant 0 : index
    %241 = vector.load %arg7[%c0_105, %c0_106, %c0_107] : memref<3x128x128xbf16, #tpu.memory_space<vmem>>, vector<1x128x128xbf16>
    %242 = vector.shape_cast %241 : vector<1x128x128xbf16> to vector<128x128xbf16>
    %cst_108 = arith.constant dense<0.000000e+00> : vector<8x128xf32>
    %243 = tpu.matmul %240, %242, %cst_108 {dimension_numbers = #tpu.dot_dimension_numbers<[1], [0], [0], [1], [0, 0, 1, 1], [], []>} : vector<8x128xbf16>, vector<128x128xbf16>, vector<8x128xf32> -> vector<8x128xf32>
    %c0_109 = arith.constant 0 : index
    %c0_110 = arith.constant 0 : index
    %c0_111 = arith.constant 0 : index
    %244 = vector.load %arg8[%c0_109, %c0_110, %c0_111] : memref<3x1x128xf32, #tpu.memory_space<vmem>>, vector<1x1x128xf32>
    %245 = vector.shape_cast %244 : vector<1x1x128xf32> to vector<1x128xf32>
    %246 = vector.broadcast %245 : vector<1x128xf32> to vector<8x128xf32>
    %247 = arith.addf %243, %246 : vector<8x128xf32>
    %cst_112 = arith.constant 5.000000e-01 : f32
    %248 = vector.broadcast %cst_112 : f32 to vector<8x128xf32>
    %249 = arith.mulf %248, %247 : vector<8x128xf32>
    %cst_113 = arith.constant 0.707106769 : f32
    %250 = vector.broadcast %cst_113 : f32 to vector<8x128xf32>
    %251 = arith.mulf %247, %250 : vector<8x128xf32>
    %252 = math.absf %251 : vector<8x128xf32>
    %cst_114 = arith.constant 0.327591091 : f32
    %253 = vector.broadcast %cst_114 : f32 to vector<8x128xf32>
    %254 = arith.mulf %253, %252 : vector<8x128xf32>
    %cst_115 = arith.constant 1.000000e+00 : f32
    %255 = vector.broadcast %cst_115 : f32 to vector<8x128xf32>
    %256 = arith.addf %255, %254 : vector<8x128xf32>
    %cst_116 = arith.constant 1.000000e+00 : f32
    %257 = vector.broadcast %cst_116 : f32 to vector<8x128xf32>
    %258 = arith.divf %257, %256 : vector<8x128xf32>
    %cst_117 = arith.constant 1.06140542 : f32
    %259 = vector.broadcast %cst_117 : f32 to vector<8x128xf32>
    %260 = arith.mulf %259, %258 : vector<8x128xf32>
    %cst_118 = arith.constant -1.45315206 : f32
    %261 = vector.broadcast %cst_118 : f32 to vector<8x128xf32>
    %262 = arith.addf %260, %261 : vector<8x128xf32>
    %263 = arith.mulf %262, %258 : vector<8x128xf32>
    %cst_119 = arith.constant 1.42141378 : f32
    %264 = vector.broadcast %cst_119 : f32 to vector<8x128xf32>
    %265 = arith.addf %263, %264 : vector<8x128xf32>
    %266 = arith.mulf %265, %258 : vector<8x128xf32>
    %cst_120 = arith.constant -0.284496725 : f32
    %267 = vector.broadcast %cst_120 : f32 to vector<8x128xf32>
    %268 = arith.addf %266, %267 : vector<8x128xf32>
    %269 = arith.mulf %268, %258 : vector<8x128xf32>
    %cst_121 = arith.constant 0.254829586 : f32
    %270 = vector.broadcast %cst_121 : f32 to vector<8x128xf32>
    %271 = arith.addf %269, %270 : vector<8x128xf32>
    %272 = arith.mulf %271, %258 : vector<8x128xf32>
    %cst_122 = arith.constant 0.000000e+00 : f32
    %273 = vector.broadcast %cst_122 : f32 to vector<8x128xf32>
    %274 = arith.subf %273, %252 : vector<8x128xf32>
    %275 = arith.mulf %274, %252 : vector<8x128xf32>
    %276 = math.exp %275 : vector<8x128xf32>
    %277 = arith.mulf %272, %276 : vector<8x128xf32>
    %cst_123 = arith.constant 1.000000e+00 : f32
    %278 = vector.broadcast %cst_123 : f32 to vector<8x128xf32>
    %279 = arith.subf %278, %277 : vector<8x128xf32>
    %cst_124 = arith.constant 0.000000e+00 : f32
    %280 = vector.broadcast %cst_124 : f32 to vector<8x128xf32>
    %281 = arith.cmpf oge, %251, %280 : vector<8x128xf32>
    %cst_125 = arith.constant 0.000000e+00 : f32
    %282 = vector.broadcast %cst_125 : f32 to vector<8x128xf32>
    %283 = arith.subf %282, %279 : vector<8x128xf32>
    %284 = arith.select %281, %279, %283 : vector<8x128xi1>, vector<8x128xf32>
    %cst_126 = arith.constant 1.000000e+00 : f32
    %285 = vector.broadcast %cst_126 : f32 to vector<8x128xf32>
    %286 = arith.addf %285, %284 : vector<8x128xf32>
    %287 = arith.mulf %249, %286 : vector<8x128xf32>
    %288 = arith.truncf %287 : vector<8x128xf32> to vector<8x128xbf16>
    %c1_127 = arith.constant 1 : index
    %c0_128 = arith.constant 0 : index
    %c0_129 = arith.constant 0 : index
    %289 = vector.load %arg7[%c1_127, %c0_128, %c0_129] : memref<3x128x128xbf16, #tpu.memory_space<vmem>>, vector<1x128x128xbf16>
    %290 = vector.shape_cast %289 : vector<1x128x128xbf16> to vector<128x128xbf16>
    %cst_130 = arith.constant dense<0.000000e+00> : vector<8x128xf32>
    %291 = tpu.matmul %288, %290, %cst_130 {dimension_numbers = #tpu.dot_dimension_numbers<[1], [0], [0], [1], [0, 0, 1, 1], [], []>} : vector<8x128xbf16>, vector<128x128xbf16>, vector<8x128xf32> -> vector<8x128xf32>
    %c1_131 = arith.constant 1 : index
    %c0_132 = arith.constant 0 : index
    %c0_133 = arith.constant 0 : index
    %292 = vector.load %arg8[%c1_131, %c0_132, %c0_133] : memref<3x1x128xf32, #tpu.memory_space<vmem>>, vector<1x1x128xf32>
    %293 = vector.shape_cast %292 : vector<1x1x128xf32> to vector<1x128xf32>
    %294 = vector.broadcast %293 : vector<1x128xf32> to vector<8x128xf32>
    %295 = arith.addf %291, %294 : vector<8x128xf32>
    %cst_134 = arith.constant 5.000000e-01 : f32
    %296 = vector.broadcast %cst_134 : f32 to vector<8x128xf32>
    %297 = arith.mulf %296, %295 : vector<8x128xf32>
    %cst_135 = arith.constant 0.707106769 : f32
    %298 = vector.broadcast %cst_135 : f32 to vector<8x128xf32>
    %299 = arith.mulf %295, %298 : vector<8x128xf32>
    %300 = math.absf %299 : vector<8x128xf32>
    %cst_136 = arith.constant 0.327591091 : f32
    %301 = vector.broadcast %cst_136 : f32 to vector<8x128xf32>
    %302 = arith.mulf %301, %300 : vector<8x128xf32>
    %cst_137 = arith.constant 1.000000e+00 : f32
    %303 = vector.broadcast %cst_137 : f32 to vector<8x128xf32>
    %304 = arith.addf %303, %302 : vector<8x128xf32>
    %cst_138 = arith.constant 1.000000e+00 : f32
    %305 = vector.broadcast %cst_138 : f32 to vector<8x128xf32>
    %306 = arith.divf %305, %304 : vector<8x128xf32>
    %cst_139 = arith.constant 1.06140542 : f32
    %307 = vector.broadcast %cst_139 : f32 to vector<8x128xf32>
    %308 = arith.mulf %307, %306 : vector<8x128xf32>
    %cst_140 = arith.constant -1.45315206 : f32
    %309 = vector.broadcast %cst_140 : f32 to vector<8x128xf32>
    %310 = arith.addf %308, %309 : vector<8x128xf32>
    %311 = arith.mulf %310, %306 : vector<8x128xf32>
    %cst_141 = arith.constant 1.42141378 : f32
    %312 = vector.broadcast %cst_141 : f32 to vector<8x128xf32>
    %313 = arith.addf %311, %312 : vector<8x128xf32>
    %314 = arith.mulf %313, %306 : vector<8x128xf32>
    %cst_142 = arith.constant -0.284496725 : f32
    %315 = vector.broadcast %cst_142 : f32 to vector<8x128xf32>
    %316 = arith.addf %314, %315 : vector<8x128xf32>
    %317 = arith.mulf %316, %306 : vector<8x128xf32>
    %cst_143 = arith.constant 0.254829586 : f32
    %318 = vector.broadcast %cst_143 : f32 to vector<8x128xf32>
    %319 = arith.addf %317, %318 : vector<8x128xf32>
    %320 = arith.mulf %319, %306 : vector<8x128xf32>
    %cst_144 = arith.constant 0.000000e+00 : f32
    %321 = vector.broadcast %cst_144 : f32 to vector<8x128xf32>
    %322 = arith.subf %321, %300 : vector<8x128xf32>
    %323 = arith.mulf %322, %300 : vector<8x128xf32>
    %324 = math.exp %323 : vector<8x128xf32>
    %325 = arith.mulf %320, %324 : vector<8x128xf32>
    %cst_145 = arith.constant 1.000000e+00 : f32
    %326 = vector.broadcast %cst_145 : f32 to vector<8x128xf32>
    %327 = arith.subf %326, %325 : vector<8x128xf32>
    %cst_146 = arith.constant 0.000000e+00 : f32
    %328 = vector.broadcast %cst_146 : f32 to vector<8x128xf32>
    %329 = arith.cmpf oge, %299, %328 : vector<8x128xf32>
    %cst_147 = arith.constant 0.000000e+00 : f32
    %330 = vector.broadcast %cst_147 : f32 to vector<8x128xf32>
    %331 = arith.subf %330, %327 : vector<8x128xf32>
    %332 = arith.select %329, %327, %331 : vector<8x128xi1>, vector<8x128xf32>
    %cst_148 = arith.constant 1.000000e+00 : f32
    %333 = vector.broadcast %cst_148 : f32 to vector<8x128xf32>
    %334 = arith.addf %333, %332 : vector<8x128xf32>
    %335 = arith.mulf %297, %334 : vector<8x128xf32>
    %336 = arith.truncf %335 : vector<8x128xf32> to vector<8x128xbf16>
    %c2_149 = arith.constant 2 : index
    %c0_150 = arith.constant 0 : index
    %c0_151 = arith.constant 0 : index
    %337 = vector.load %arg7[%c2_149, %c0_150, %c0_151] : memref<3x128x128xbf16, #tpu.memory_space<vmem>>, vector<1x128x128xbf16>
    %338 = vector.shape_cast %337 : vector<1x128x128xbf16> to vector<128x128xbf16>
    %cst_152 = arith.constant dense<0.000000e+00> : vector<8x128xf32>
    %339 = tpu.matmul %336, %338, %cst_152 {dimension_numbers = #tpu.dot_dimension_numbers<[1], [0], [0], [1], [0, 0, 1, 1], [], []>} : vector<8x128xbf16>, vector<128x128xbf16>, vector<8x128xf32> -> vector<8x128xf32>
    %c2_153 = arith.constant 2 : index
    %c0_154 = arith.constant 0 : index
    %c0_155 = arith.constant 0 : index
    %340 = vector.load %arg8[%c2_153, %c0_154, %c0_155] : memref<3x1x128xf32, #tpu.memory_space<vmem>>, vector<1x1x128xf32>
    %341 = vector.shape_cast %340 : vector<1x1x128xf32> to vector<1x128xf32>
    %342 = vector.broadcast %341 : vector<1x128xf32> to vector<8x128xf32>
    %343 = arith.addf %339, %342 : vector<8x128xf32>
    %cst_156 = arith.constant 5.000000e-01 : f32
    %344 = vector.broadcast %cst_156 : f32 to vector<8x128xf32>
    %345 = arith.mulf %344, %343 : vector<8x128xf32>
    %cst_157 = arith.constant 0.707106769 : f32
    %346 = vector.broadcast %cst_157 : f32 to vector<8x128xf32>
    %347 = arith.mulf %343, %346 : vector<8x128xf32>
    %348 = math.absf %347 : vector<8x128xf32>
    %cst_158 = arith.constant 0.327591091 : f32
    %349 = vector.broadcast %cst_158 : f32 to vector<8x128xf32>
    %350 = arith.mulf %349, %348 : vector<8x128xf32>
    %cst_159 = arith.constant 1.000000e+00 : f32
    %351 = vector.broadcast %cst_159 : f32 to vector<8x128xf32>
    %352 = arith.addf %351, %350 : vector<8x128xf32>
    %cst_160 = arith.constant 1.000000e+00 : f32
    %353 = vector.broadcast %cst_160 : f32 to vector<8x128xf32>
    %354 = arith.divf %353, %352 : vector<8x128xf32>
    %cst_161 = arith.constant 1.06140542 : f32
    %355 = vector.broadcast %cst_161 : f32 to vector<8x128xf32>
    %356 = arith.mulf %355, %354 : vector<8x128xf32>
    %cst_162 = arith.constant -1.45315206 : f32
    %357 = vector.broadcast %cst_162 : f32 to vector<8x128xf32>
    %358 = arith.addf %356, %357 : vector<8x128xf32>
    %359 = arith.mulf %358, %354 : vector<8x128xf32>
    %cst_163 = arith.constant 1.42141378 : f32
    %360 = vector.broadcast %cst_163 : f32 to vector<8x128xf32>
    %361 = arith.addf %359, %360 : vector<8x128xf32>
    %362 = arith.mulf %361, %354 : vector<8x128xf32>
    %cst_164 = arith.constant -0.284496725 : f32
    %363 = vector.broadcast %cst_164 : f32 to vector<8x128xf32>
    %364 = arith.addf %362, %363 : vector<8x128xf32>
    %365 = arith.mulf %364, %354 : vector<8x128xf32>
    %cst_165 = arith.constant 0.254829586 : f32
    %366 = vector.broadcast %cst_165 : f32 to vector<8x128xf32>
    %367 = arith.addf %365, %366 : vector<8x128xf32>
    %368 = arith.mulf %367, %354 : vector<8x128xf32>
    %cst_166 = arith.constant 0.000000e+00 : f32
    %369 = vector.broadcast %cst_166 : f32 to vector<8x128xf32>
    %370 = arith.subf %369, %348 : vector<8x128xf32>
    %371 = arith.mulf %370, %348 : vector<8x128xf32>
    %372 = math.exp %371 : vector<8x128xf32>
    %373 = arith.mulf %368, %372 : vector<8x128xf32>
    %cst_167 = arith.constant 1.000000e+00 : f32
    %374 = vector.broadcast %cst_167 : f32 to vector<8x128xf32>
    %375 = arith.subf %374, %373 : vector<8x128xf32>
    %cst_168 = arith.constant 0.000000e+00 : f32
    %376 = vector.broadcast %cst_168 : f32 to vector<8x128xf32>
    %377 = arith.cmpf oge, %347, %376 : vector<8x128xf32>
    %cst_169 = arith.constant 0.000000e+00 : f32
    %378 = vector.broadcast %cst_169 : f32 to vector<8x128xf32>
    %379 = arith.subf %378, %375 : vector<8x128xf32>
    %380 = arith.select %377, %375, %379 : vector<8x128xi1>, vector<8x128xf32>
    %cst_170 = arith.constant 1.000000e+00 : f32
    %381 = vector.broadcast %cst_170 : f32 to vector<8x128xf32>
    %382 = arith.addf %381, %380 : vector<8x128xf32>
    %383 = arith.mulf %345, %382 : vector<8x128xf32>
    %384 = arith.truncf %383 : vector<8x128xf32> to vector<8x128xbf16>
    %c0_171 = arith.constant 0 : index
    %c0_172 = arith.constant 0 : index
    %385 = vector.load %arg9[%c0_171, %c0_172] : memref<128x128xbf16, #tpu.memory_space<vmem>>, vector<128x128xbf16>
    %cst_173 = arith.constant dense<0.000000e+00> : vector<8x128xf32>
    %386 = tpu.matmul %384, %385, %cst_173 {dimension_numbers = #tpu.dot_dimension_numbers<[1], [0], [0], [1], [0, 0, 1, 1], [], []>} : vector<8x128xbf16>, vector<128x128xbf16>, vector<8x128xf32> -> vector<8x128xf32>
    %c0_174 = arith.constant 0 : index
    %c0_175 = arith.constant 0 : index
    %387 = vector.load %arg10[%c0_174, %c0_175] : memref<1x128xf32, #tpu.memory_space<vmem>>, vector<1x128xf32>
    %388 = vector.broadcast %387 : vector<1x128xf32> to vector<8x128xf32>
    %389 = arith.addf %386, %388 : vector<8x128xf32>
    %c0_176 = arith.constant 0 : index
    %c0_177 = arith.constant 0 : index
    %390 = vector.load %arg11[%c0_176, %c0_177] : memref<8x128xf32, #tpu.memory_space<vmem>>, vector<8x128xf32>
    tpu.vector_store %arg11[%c0_176, %c0_177], %389 {strides = array<i32>} : memref<8x128xf32, #tpu.memory_space<vmem>>, vector<8x128xf32>,
    return
  }
  func.func @transform_0(%arg0: i32) -> (i32, i32) {
    %c0_i32 = arith.constant 0 : i32
    %c0_i32_0 = arith.constant 0 : i32
    return %arg0, %c0_i32 : i32, i32
  }
  func.func @transform_1(%arg0: i32) -> (i32, i32, i32) {
    %c0_i32 = arith.constant 0 : i32
    %c0_i32_0 = arith.constant 0 : i32
    %c0_i32_1 = arith.constant 0 : i32
    return %arg0, %c0_i32, %c0_i32_0 : i32, i32, i32
  }
  func.func @transform_2(%arg0: i32) -> (i32, i32) {
    %c0_i32 = arith.constant 0 : i32
    %c0_i32_0 = arith.constant 0 : i32
    %c0_i32_1 = arith.constant 0 : i32
    return %c0_i32, %c0_i32_0 : i32, i32
  }
  func.func @transform_3(%arg0: i32) -> (i32, i32) {
    %c0_i32 = arith.constant 0 : i32
    %c0_i32_0 = arith.constant 0 : i32
    %c0_i32_1 = arith.constant 0 : i32
    return %c0_i32, %c0_i32_0 : i32, i32
  }
  func.func @transform_4(%arg0: i32) -> (i32, i32, i32) {
    %c0_i32 = arith.constant 0 : i32
    %c0_i32_0 = arith.constant 0 : i32
    %c0_i32_1 = arith.constant 0 : i32
    %c0_i32_2 = arith.constant 0 : i32
    return %c0_i32, %c0_i32_0, %c0_i32_1 : i32, i32, i32
  }
  func.func @transform_5(%arg0: i32) -> (i32, i32, i32) {
    %c0_i32 = arith.constant 0 : i32
    %c0_i32_0 = arith.constant 0 : i32
    %c0_i32_1 = arith.constant 0 : i32
    %c0_i32_2 = arith.constant 0 : i32
    return %c0_i32, %c0_i32_0, %c0_i32_1 : i32, i32, i32
  }
  func.func @transform_6(%arg0: i32) -> (i32, i32, i32) {
    %c0_i32 = arith.constant 0 : i32
    %c0_i32_0 = arith.constant 0 : i32
    %c0_i32_1 = arith.constant 0 : i32
    %c0_i32_2 = arith.constant 0 : i32
    return %c0_i32, %c0_i32_0, %c0_i32_1 : i32, i32, i32
  }
  func.func @transform_7(%arg0: i32) -> (i32, i32, i32) {
    %c0_i32 = arith.constant 0 : i32
    %c0_i32_0 = arith.constant 0 : i32
    %c0_i32_1 = arith.constant 0 : i32
    %c0_i32_2 = arith.constant 0 : i32
    return %c0_i32, %c0_i32_0, %c0_i32_1 : i32, i32, i32
  }
  func.func @transform_8(%arg0: i32) -> (i32, i32) {
    %c0_i32 = arith.constant 0 : i32
    %c0_i32_0 = arith.constant 0 : i32
    %c0_i32_1 = arith.constant 0 : i32
    return %c0_i32, %c0_i32_0 : i32, i32
  }
  func.func @transform_9(%arg0: i32) -> (i32, i32) {
    %c0_i32 = arith.constant 0 : i32
    %c0_i32_0 = arith.constant 0 : i32
    %c0_i32_1 = arith.constant 0 : i32
    return %c0_i32, %c0_i32_0 : i32, i32
  }
  func.func @transform_10(%arg0: i32) -> (i32, i32) {
    %c0_i32 = arith.constant 0 : i32
    %c0_i32_0 = arith.constant 0 : i32
    return %arg0, %c0_i32 : i32, i32
  }
}

</mosaic_0001>

<llo_original>
// kernel: tpu_custom_call.1
$region0: #{tpu_custom_call.1}
  #allocation0 [shape = 'u32[]', space=smem, size = 0x4, offset = 0x4, fixed_abs, tag = 'smem constant byte address 0x4 - core index']
  #allocation1 [shape = 'u32[144,128]{1,0:T(1,128)}', space=vmem, size = 0x12000, scoped, tag = 'internal scratch']
  %s0 = inlined_call_operand.vmem [shape: bf16[64,16], index: 0, kind: input, shape index: {}]
  %s1 = inlined_call_operand.vmem [shape: f32[8,8,1], index: 1, kind: input, shape index: {}]
  %s2 = inlined_call_operand.vmem [shape: bf16[16,128], index: 2, kind: input, shape index: {}]
  %s3 = inlined_call_operand.vmem [shape: f32[1,128], index: 3, kind: input, shape index: {}]
  %s4 = inlined_call_operand.hbm [shape: bf16[3,128,128], index: 4, kind: input, shape index: {}]
  %s5 = inlined_call_operand.vmem [shape: f32[3,1,128], index: 5, kind: input, shape index: {}]
  %s6 = inlined_call_operand.hbm [shape: bf16[3,128,128], index: 6, kind: input, shape index: {}]
  %s7 = inlined_call_operand.vmem [shape: f32[3,1,128], index: 7, kind: input, shape index: {}]
  %s8 = inlined_call_operand.vmem [shape: bf16[128,128], index: 8, kind: input, shape index: {}]
  %s9 = inlined_call_operand.vmem [shape: f32[1,128], index: 9, kind: input, shape index: {}]
  %s10 = inlined_call_operand.hbm [shape: f32[8,128], index: 10, kind: output, shape index: {}]
  %s11 = sld [smem:[#allocation0]]
  $region58: #{tpu_custom_call.1} parent=0
    _
  %s13 = ssub.s32 1, %s11
  %s14 = scalar_select 0, %s13, %s11
  $region1: #{tpu_custom_call.1} parent=0
    #allocation2 [shape = 'u8[98304]{0}', space=vmem, size = 0x18000, scoped, tag = 'input window, operand 4, single buffered']
    #allocation3 [shape = 's32[1]{0}', space=sflag, size = 0x4, scoped, tag = 'scoped memory for tpu_custom_call.1']
    #allocation4 [shape = 's32[1]{0}', space=sflag, size = 0x4, scoped, tag = 'scoped memory for tpu_custom_call.1']
    #allocation5 [shape = 'u8[98304]{0}', space=vmem, size = 0x18000, scoped, tag = 'input window, operand 6, single buffered']
    #allocation6 [shape = 's32[1]{0}', space=sflag, size = 0x4, scoped, tag = 'scoped memory for tpu_custom_call.1']
    #allocation7 [shape = 'u8[4096]{0}', space=vmem, size = 0x1000, scoped, tag = 'output window, operand 0, single buffered']
    %15 = vsyncpa [#allocation3], 0
    %16 = vsyncpa [#allocation6], 0
    %17 = vsyncpa [#allocation4], 0
    // Predicated region
    $region2: #{tpu_custom_call.1} parent=1 // pred_check
      _
    $region3: #{tpu_custom_call.1} parent=1 // pred_check_branch
      %19 = sbr.rel (0) target = $region5
    $region4: #{tpu_custom_call.1} parent=1 // pred_region
      _
    $region5: #{tpu_custom_call.1} parent=1 // pred_fallthru
      _
    // Predicated region
    $region6: #{tpu_custom_call.1} parent=1 // pred_check
      _
    $region7: #{tpu_custom_call.1} parent=1 // pred_check_branch
      %21 = sbr.rel (0) target = $region9
    $region8: #{tpu_custom_call.1} parent=1 // pred_region
      _
    $region9: #{tpu_custom_call.1} parent=1 // pred_fallthru
      _
    // Predicated region
    $region10: #{tpu_custom_call.1} parent=1 // pred_check
      _
    $region11: #{tpu_custom_call.1} parent=1 // pred_check_branch
      %23 = sbr.rel (0) target = $region13
    $region12: #{tpu_custom_call.1} parent=1 // pred_region
      _
    $region13: #{tpu_custom_call.1} parent=1 // pred_fallthru
      _
    // Predicated region
    $region14: #{tpu_custom_call.1} parent=1 // pred_check
      _
    $region15: #{tpu_custom_call.1} parent=1 // pred_check_branch
      %25 = sbr.rel (0) target = $region17
    $region16: #{tpu_custom_call.1} parent=1 // pred_region
      _
    $region17: #{tpu_custom_call.1} parent=1 // pred_fallthru
      _
    // Predicated region
    $region18: #{tpu_custom_call.1} parent=1 // pred_check
      _
    $region19: #{tpu_custom_call.1} parent=1 // pred_check_branch
      %27 = sbr.rel (0) target = $region21
    $region20: #{tpu_custom_call.1} parent=1 // pred_region
      %s29 = ssub.s32 3072, 3072
      %30 = vsyncadd [#allocation3], %s29
      %s31 = sshll.u32 [#allocation2], 4
      %s32 = int_to_ptr.vmem [resolvable:$true] %s31
      %37 = dma.hbm_to_vmem [thread:$0]  %s4, 3072, %s32, [#allocation3], 64, 64, 4
    $region21: #{tpu_custom_call.1} parent=1 // pred_fallthru
      _
    // Predicated region
    $region22: #{tpu_custom_call.1} parent=1 // pred_check
      _
    $region23: #{tpu_custom_call.1} parent=1 // pred_check_branch
      %39 = sbr.rel (0) target = $region25
    $region24: #{tpu_custom_call.1} parent=1 // pred_region
      _
    $region25: #{tpu_custom_call.1} parent=1 // pred_fallthru
      _
    // Predicated region
    $region26: #{tpu_custom_call.1} parent=1 // pred_check
      _
    $region27: #{tpu_custom_call.1} parent=1 // pred_check_branch
      %41 = sbr.rel (0) target = $region29
    $region28: #{tpu_custom_call.1} parent=1 // pred_region
      %s43 = ssub.s32 3072, 3072
      %44 = vsyncadd [#allocation6], %s43
      %s45 = sshll.u32 [#allocation5], 4
      %s46 = int_to_ptr.vmem [resolvable:$true] %s45
      %51 = dma.hbm_to_vmem [thread:$0]  %s6, 3072, %s46, [#allocation6], 64, 64, 4
    $region29: #{tpu_custom_call.1} parent=1 // pred_fallthru
      _
    // Predicated region
    $region30: #{tpu_custom_call.1} parent=1 // pred_check
      _
    $region31: #{tpu_custom_call.1} parent=1 // pred_check_branch
      %53 = sbr.rel (0) target = $region33
    $region32: #{tpu_custom_call.1} parent=1 // pred_region
      _
    $region33: #{tpu_custom_call.1} parent=1 // pred_fallthru
      _
    // Predicated region
    $region34: #{tpu_custom_call.1} parent=1 // pred_check
      _
    $region35: #{tpu_custom_call.1} parent=1 // pred_check_branch
      %55 = sbr.rel (0) target = $region37
    $region36: #{tpu_custom_call.1} parent=1 // pred_region
      _
    $region37: #{tpu_custom_call.1} parent=1 // pred_fallthru
      _
    // Predicated region
    $region38: #{tpu_custom_call.1} parent=1 // pred_check
      _
    $region39: #{tpu_custom_call.1} parent=1 // pred_check_branch
      %57 = sbr.rel (0) target = $region41
    $region40: #{tpu_custom_call.1} parent=1 // pred_region
      _
    $region41: #{tpu_custom_call.1} parent=1 // pred_fallthru
      _
    // Predicated region
    $region42: #{tpu_custom_call.1} parent=1 // pred_check
      _
    $region43: #{tpu_custom_call.1} parent=1 // pred_check_branch
      %59 = sbr.rel (0) target = $region45
    $region44: #{tpu_custom_call.1} parent=1 // pred_region
      %60 = dma.done [#allocation3], 3072
    $region45: #{tpu_custom_call.1} parent=1 // pred_fallthru
      _
    // Predicated region
    $region46: #{tpu_custom_call.1} parent=1 // pred_check
      _
    $region47: #{tpu_custom_call.1} parent=1 // pred_check_branch
      %62 = sbr.rel (0) target = $region49
    $region48: #{tpu_custom_call.1} parent=1 // pred_region
      %63 = dma.done [#allocation6], 3072
    $region49: #{tpu_custom_call.1} parent=1 // pred_fallthru
      _
    %v65 = vld [vmem:[%s0] sm:$0xf]
    %v66 = vld [vmem:[%s0 + $0x4] sm:$0xf]
    %v67 = vld [vmem:[%s0 + $0x8] sm:$0xf]
    %v68 = vld [vmem:[%s0 + $0xc] sm:$0xf]
    %v69 = vld [vmem:[%s0 + $0x10] sm:$0xf]
    %v70 = vld [vmem:[%s0 + $0x14] sm:$0xf]
    %v71 = vld [vmem:[%s0 + $0x18] sm:$0xf]
    %v72 = vld [vmem:[%s0 + $0x1c] sm:$0xf]
    %v73 = vld [vmem:[%s2] sm:$0xf]
    %v74 = vld [vmem:[%s2 + $0x4] sm:$0xf]
    %v75 = vld [vmem:[%s3] sm:$0x1]
    %v77 = vlaneseq
    %v78 = vshrl.u32 %v77, 7
    %v79 = vsub.s32 0, %v78
    %v80 = vrot.slane %v75, %v79
    %v90 = vunpack.c.l.b16 %v65
    %v91 = vunpack.c.l.b16 %v66
    %v92 = vunpack.c.l.b16 %v67
    %v93 = vunpack.c.l.b16 %v68
    %v94 = vunpack.c.l.b16 %v69
    %v95 = vunpack.c.l.b16 %v70
    %v96 = vunpack.c.l.b16 %v71
    %v97 = vunpack.c.l.b16 %v72
    %v98 = vpack.c.b16 %v91, %v90
    %v99 = vpack.c.b16 %v93, %v92
    %v100 = vpack.c.b16 %v95, %v94
    %v101 = vpack.c.b16 %v97, %v96
    %v104 = vunpack.c.l.b16 %v73
    %v105 = vunpack.c.l.b16 %v74
    %v106 = vpack.c.b16 %v105, %v104
    %vm108 = vcmask 130048
    %v110 = vsel %vm108, %v98, 0
    %v113 = vsel %vm108, %v99, 0
    %v116 = vsel %vm108, %v100, 0
    %v119 = vsel %vm108, %v101, 0
    %121 = vmatprep.subr.bf16.mxu0 0
    %122 = vmatpush1.bf16.msra.mxu0 %v106
    %123 = vmatprep.subr.bf16.mxu0 0
    %124 = vmatpush1.bf16.msra.mxu0 0
    %125 = vmatprep.subr.bf16.mxu0 0
    %126 = vmatpush1.bf16.msra.mxu0 0
    %127 = vmatprep.subr.bf16.mxu0 0
    %128 = vmatpush1.bf16.msra.mxu0 0
    %129 = vmatprep.subr.bf16.mxu0 0
    %130 = vmatpush1.bf16.msra.mxu0 0
    %131 = vmatprep.subr.bf16.mxu0 0
    %132 = vmatpush1.bf16.msra.mxu0 0
    %133 = vmatprep.subr.bf16.mxu0 0
    %134 = vmatpush1.bf16.msra.mxu0 0
    %135 = vmatprep.subr.bf16.mxu0 0
    %136 = vmatpush1.bf16.msra.mxu0 0
    %137 = vmatprep.subr.bf16.mxu0 0
    %138 = vmatpush1.bf16.msra.mxu0 0
    %139 = vmatprep.subr.bf16.mxu0 0
    %140 = vmatpush1.bf16.msra.mxu0 0
    %141 = vmatprep.subr.bf16.mxu0 0
    %142 = vmatpush1.bf16.msra.mxu0 0
    %143 = vmatprep.subr.bf16.mxu0 0
    %144 = vmatpush1.bf16.msra.mxu0 0
    %145 = vmatprep.subr.bf16.mxu0 0
    %146 = vmatpush1.bf16.msra.mxu0 0
    %147 = vmatprep.subr.bf16.mxu0 0
    %148 = vmatpush1.bf16.msra.mxu0 0
    %149 = vmatprep.subr.bf16.mxu0 0
    %150 = vmatpush1.bf16.msra.mxu0 0
    %151 = vmatprep.subr.bf16.mxu0 0
    %152 = vmatpush1.bf16.msra.mxu0 0
    %153 = vmatprep.mubr.bf16.mxu0 0
    %154 = vmatmul.mubr.bf16.gmra.mrb[0].mxu0 %v110
    %v155 = vpop.f32.mrb[0].mxu0
    %v156 = vadd.f32 %v80, %v155
    %v157 = vpop.f32.mrb[0].mxu0
    %v158 = vpop.f32.mrb[0].mxu0
    %v159 = vadd.f32 %v80, %v158
    %v160 = vpop.f32.mrb[0].mxu0
    %161 = vmatprep.mubr.bf16.mxu0 0
    %162 = vmatmul.mubr.bf16.gmra.mrb[0].mxu0 %v113
    %v163 = vpop.f32.mrb[0].mxu0
    %v164 = vadd.f32 %v80, %v163
    %v165 = vpop.f32.mrb[0].mxu0
    %v166 = vpop.f32.mrb[0].mxu0
    %v167 = vadd.f32 %v80, %v166
    %v168 = vpop.f32.mrb[0].mxu0
    %169 = vmatprep.mubr.bf16.mxu0 0
    %170 = vmatmul.mubr.bf16.gmra.mrb[0].mxu0 %v116
    %v171 = vpop.f32.mrb[0].mxu0
    %v172 = vadd.f32 %v80, %v171
    %v173 = vpop.f32.mrb[0].mxu0
    %v174 = vpop.f32.mrb[0].mxu0
    %v175 = vadd.f32 %v80, %v174
    %v176 = vpop.f32.mrb[0].mxu0
    %177 = vmatprep.mubr.bf16.mxu0 0
    %178 = vmatmul.mubr.bf16.gmra.mrb[0].mxu0 %v119
    %v179 = vpop.f32.mrb[0].mxu0
    %v180 = vadd.f32 %v80, %v179
    %v181 = vpop.f32.mrb[0].mxu0
    %v182 = vpop.f32.mrb[0].mxu0
    %v183 = vadd.f32 %v80, %v182
    %v184 = vpop.f32.mrb[0].mxu0
    %185 = vdwg.mxu0
    %v186 = vmul.f32 %v156, 0.5
    %v187 = vmul.f32 %v159, 0.5
    %v188 = vmul.f32 %v164, 0.5
    %v189 = vmul.f32 %v167, 0.5
    %v190 = vmul.f32 %v172, 0.5
    %v191 = vmul.f32 %v175, 0.5
    %v192 = vmul.f32 %v180, 0.5
    %v193 = vmul.f32 %v183, 0.5
    %v194 = vmul.f32 %v156, 0.70710677
    %v195 = vmul.f32 %v159, 0.70710677
    %v196 = vmul.f32 %v164, 0.70710677
    %v197 = vmul.f32 %v167, 0.70710677
    %v198 = vmul.f32 %v172, 0.70710677
    %v199 = vmul.f32 %v175, 0.70710677
    %v200 = vmul.f32 %v180, 0.70710677
    %v201 = vmul.f32 %v183, 0.70710677
    %v202 = vand.u32 2147483647, %v194
    %v203 = vand.u32 2147483647, %v195
    %v204 = vand.u32 2147483647, %v196
    %v205 = vand.u32 2147483647, %v197
    %v206 = vand.u32 2147483647, %v198
    %v207 = vand.u32 2147483647, %v199
    %v208 = vand.u32 2147483647, %v200
    %v209 = vand.u32 2147483647, %v201
    %v210 = vmul.f32 %v202, 0.3275911
    %v211 = vmul.f32 %v203, 0.3275911
    %v212 = vmul.f32 %v204, 0.3275911
    %v213 = vmul.f32 %v205, 0.3275911
    %v214 = vmul.f32 %v206, 0.3275911
    %v215 = vmul.f32 %v207, 0.3275911
    %v216 = vmul.f32 %v208, 0.3275911
    %v217 = vmul.f32 %v209, 0.3275911
    %v218 = vadd.f32 %v210, 1.0
    %v219 = vadd.f32 %v211, 1.0
    %v220 = vadd.f32 %v212, 1.0
    %v221 = vadd.f32 %v213, 1.0
    %v222 = vadd.f32 %v214, 1.0
    %v223 = vadd.f32 %v215, 1.0
    %v224 = vadd.f32 %v216, 1.0
    %v225 = vadd.f32 %v217, 1.0
    %v226 = vrcp.pop %v218
    %v227 = vmul.f32 1.0, %v226
    %v228 = vrcp.pop %v219
    %v229 = vmul.f32 1.0, %v228
    %v230 = vrcp.pop %v220
    %v231 = vmul.f32 1.0, %v230
    %v232 = vrcp.pop %v221
    %v233 = vmul.f32 1.0, %v232
    %v234 = vrcp.pop %v222
    %v235 = vmul.f32 1.0, %v234
    %v236 = vrcp.pop %v223
    %v237 = vmul.f32 1.0, %v236
    %v238 = vrcp.pop %v224
    %v239 = vmul.f32 1.0, %v238
    %v240 = vrcp.pop %v225
    %v241 = vmul.f32 1.0, %v240
    %v242 = vmul.f32 %v227, 1.0614054
    %v243 = vmul.f32 %v229, 1.0614054
    %v244 = vmul.f32 %v231, 1.0614054
    %v245 = vmul.f32 %v233, 1.0614054
    %v246 = vmul.f32 %v235, 1.0614054
    %v247 = vmul.f32 %v237, 1.0614054
    %v248 = vmul.f32 %v239, 1.0614054
    %v249 = vmul.f32 %v241, 1.0614054
    %v250 = vadd.f32 %v242, -1.4531521
    %v251 = vadd.f32 %v243, -1.4531521
    %v252 = vadd.f32 %v244, -1.4531521
    %v253 = vadd.f32 %v245, -1.4531521
    %v254 = vadd.f32 %v246, -1.4531521
    %v255 = vadd.f32 %v247, -1.4531521
    %v256 = vadd.f32 %v248, -1.4531521
    %v257 = vadd.f32 %v249, -1.4531521
    %v258 = vmul.f32 %v250, %v227
    %v259 = vmul.f32 %v251, %v229
    %v260 = vmul.f32 %v252, %v231
    %v261 = vmul.f32 %v253, %v233
    %v262 = vmul.f32 %v254, %v235
    %v263 = vmul.f32 %v255, %v237
    %v264 = vmul.f32 %v256, %v239
    %v265 = vmul.f32 %v257, %v241
    %v266 = vadd.f32 %v258, 1.4214138
    %v267 = vadd.f32 %v259, 1.4214138
    %v268 = vadd.f32 %v260, 1.4214138
    %v269 = vadd.f32 %v261, 1.4214138
    %v270 = vadd.f32 %v262, 1.4214138
    %v271 = vadd.f32 %v263, 1.4214138
    %v272 = vadd.f32 %v264, 1.4214138
    %v273 = vadd.f32 %v265, 1.4214138
    %v274 = vmul.f32 %v266, %v227
    %v275 = vmul.f32 %v267, %v229
    %v276 = vmul.f32 %v268, %v231
    %v277 = vmul.f32 %v269, %v233
    %v278 = vmul.f32 %v270, %v235
    %v279 = vmul.f32 %v271, %v237
    %v280 = vmul.f32 %v272, %v239
    %v281 = vmul.f32 %v273, %v241
    %v282 = vadd.f32 %v274, -0.28449672
    %v283 = vadd.f32 %v275, -0.28449672
    %v284 = vadd.f32 %v276, -0.28449672
    %v285 = vadd.f32 %v277, -0.28449672
    %v286 = vadd.f32 %v278, -0.28449672
    %v287 = vadd.f32 %v279, -0.28449672
    %v288 = vadd.f32 %v280, -0.28449672
    %v289 = vadd.f32 %v281, -0.28449672
    %v290 = vmul.f32 %v282, %v227
    %v291 = vmul.f32 %v283, %v229
    %v292 = vmul.f32 %v284, %v231
    %v293 = vmul.f32 %v285, %v233
    %v294 = vmul.f32 %v286, %v235
    %v295 = vmul.f32 %v287, %v237
    %v296 = vmul.f32 %v288, %v239
    %v297 = vmul.f32 %v289, %v241
    %v298 = vadd.f32 %v290, 0.2548296
    %v299 = vadd.f32 %v291, 0.2548296
    %v300 = vadd.f32 %v292, 0.2548296
    %v301 = vadd.f32 %v293, 0.2548296
    %v302 = vadd.f32 %v294, 0.2548296
    %v303 = vadd.f32 %v295, 0.2548296
    %v304 = vadd.f32 %v296, 0.2548296
    %v305 = vadd.f32 %v297, 0.2548296
    %v306 = vmul.f32 %v298, %v227
    %v307 = vmul.f32 %v299, %v229
    %v308 = vmul.f32 %v300, %v231
    %v309 = vmul.f32 %v301, %v233
    %v310 = vmul.f32 %v302, %v235
    %v311 = vmul.f32 %v303, %v237
    %v312 = vmul.f32 %v304, %v239
    %v313 = vmul.f32 %v305, %v241
    %v314 = vsub.f32 0.0, %v202
    %v315 = vsub.f32 0.0, %v203
    %v316 = vsub.f32 0.0, %v204
    %v317 = vsub.f32 0.0, %v205
    %v318 = vsub.f32 0.0, %v206
    %v319 = vsub.f32 0.0, %v207
    %v320 = vsub.f32 0.0, %v208
    %v321 = vsub.f32 0.0, %v209
    %v322 = vmul.f32 %v314, %v202
    %v323 = vmul.f32 %v315, %v203
    %v324 = vmul.f32 %v316, %v204
    %v325 = vmul.f32 %v317, %v205
    %v326 = vmul.f32 %v318, %v206
    %v327 = vmul.f32 %v319, %v207
    %v328 = vmul.f32 %v320, %v208
    %v329 = vmul.f32 %v321, %v209
    %v330 = vmul.f32 %v322, 1.442695
    %v331 = vpow.pop %v330
    %v332 = vmul.f32 %v323, 1.442695
    %v333 = vpow.pop %v332
    %v334 = vmul.f32 %v324, 1.442695
    %v335 = vpow.pop %v334
    %v336 = vmul.f32 %v325, 1.442695
    %v337 = vpow.pop %v336
    %v338 = vmul.f32 %v326, 1.442695
    %v339 = vpow.pop %v338
    %v340 = vmul.f32 %v327, 1.442695
    %v341 = vpow.pop %v340
    %v342 = vmul.f32 %v328, 1.442695
    %v343 = vpow.pop %v342
    %v344 = vmul.f32 %v329, 1.442695
    %v345 = vpow.pop %v344
    %v346 = vmul.f32 %v306, %v331
    %v347 = vmul.f32 %v307, %v333
    %v348 = vmul.f32 %v308, %v335
    %v349 = vmul.f32 %v309, %v337
    %v350 = vmul.f32 %v310, %v339
    %v351 = vmul.f32 %v311, %v341
    %v352 = vmul.f32 %v312, %v343
    %v353 = vmul.f32 %v313, %v345
    %v354 = vsub.f32 1.0, %v346
    %v355 = vsub.f32 1.0, %v347
    %v356 = vsub.f32 1.0, %v348
    %v357 = vsub.f32 1.0, %v349
    %v358 = vsub.f32 1.0, %v350
    %v359 = vsub.f32 1.0, %v351
    %v360 = vsub.f32 1.0, %v352
    %v361 = vsub.f32 1.0, %v353
    %vm362 = vcmp.ge.f32.partialorder %v194, 0.0
    %vm363 = vcmp.ge.f32.partialorder %v195, 0.0
    %vm364 = vcmp.ge.f32.partialorder %v196, 0.0
    %vm365 = vcmp.ge.f32.partialorder %v197, 0.0
    %vm366 = vcmp.ge.f32.partialorder %v198, 0.0
    %vm367 = vcmp.ge.f32.partialorder %v199, 0.0
    %vm368 = vcmp.ge.f32.partialorder %v200, 0.0
    %vm369 = vcmp.ge.f32.partialorder %v201, 0.0
    %v370 = vsub.f32 0.0, %v354
    %v371 = vsub.f32 0.0, %v355
    %v372 = vsub.f32 0.0, %v356
    %v373 = vsub.f32 0.0, %v357
    %v374 = vsub.f32 0.0, %v358
    %v375 = vsub.f32 0.0, %v359
    %v376 = vsub.f32 0.0, %v360
    %v377 = vsub.f32 0.0, %v361
    %v378 = vsel %vm362, %v354, %v370
    %v379 = vsel %vm363, %v355, %v371
    %v380 = vsel %vm364, %v356, %v372
    %v381 = vsel %vm365, %v357, %v373
    %v382 = vsel %vm366, %v358, %v374
    %v383 = vsel %vm367, %v359, %v375
    %v384 = vsel %vm368, %v360, %v376
    %v385 = vsel %vm369, %v361, %v377
    %v386 = vadd.f32 %v378, 1.0
    %v387 = vadd.f32 %v379, 1.0
    %v388 = vadd.f32 %v380, 1.0
    %v389 = vadd.f32 %v381, 1.0
    %v390 = vadd.f32 %v382, 1.0
    %v391 = vadd.f32 %v383, 1.0
    %v392 = vadd.f32 %v384, 1.0
    %v393 = vadd.f32 %v385, 1.0
    %v394 = vmul.f32 %v186, %v386
    %v395 = vmul.f32 %v187, %v387
    %v396 = vmul.f32 %v188, %v388
    %v397 = vmul.f32 %v189, %v389
    %v398 = vmul.f32 %v190, %v390
    %v399 = vmul.f32 %v191, %v391
    %v400 = vmul.f32 %v192, %v392
    %v401 = vmul.f32 %v193, %v393
    %v402 = vpack.c.bf16 %v395, %v394
    %v403 = vpack.c.bf16 %v397, %v396
    %v404 = vpack.c.bf16 %v399, %v398
    %v405 = vpack.c.bf16 %v401, %v400
    %v406 = vld [vmem:[#allocation2] sm:$0xf]
    %v407 = vld [vmem:[#allocation2 + $0x4] sm:$0xf]
    %v408 = vld [vmem:[#allocation2 + $0x8] sm:$0xf]
    %v409 = vld [vmem:[#allocation2 + $0xc] sm:$0xf]
    %v410 = vld [vmem:[#allocation2 + $0x10] sm:$0xf]
    %v411 = vld [vmem:[#allocation2 + $0x14] sm:$0xf]
    %v412 = vld [vmem:[#allocation2 + $0x18] sm:$0xf]
    %v413 = vld [vmem:[#allocation2 + $0x1c] sm:$0xf]
    %v414 = vld [vmem:[#allocation2 + $0x20] sm:$0xf]
    %v415 = vld [vmem:[#allocation2 + $0x24] sm:$0xf]
    %v416 = vld [vmem:[#allocation2 + $0x28] sm:$0xf]
    %v417 = vld [vmem:[#allocation2 + $0x2c] sm:$0xf]
    %v418 = vld [vmem:[#allocation2 + $0x30] sm:$0xf]
    %v419 = vld [vmem:[#allocation2 + $0x34] sm:$0xf]
    %v420 = vld [vmem:[#allocation2 + $0x38] sm:$0xf]
    %v421 = vld [vmem:[#allocation2 + $0x3c] sm:$0xf]
    %v422 = vld [vmem:[%s5] sm:$0x1]
    %v424 = vlaneseq
    %v425 = vshrl.u32 %v424, 7
    %v426 = vsub.s32 0, %v425
    %v427 = vrot.slane %v422, %v426
    %v445 = vunpack.c.l.b16 %v406
    %v446 = vunpack.c.l.b16 %v407
    %v447 = vunpack.c.l.b16 %v408
    %v448 = vunpack.c.l.b16 %v409
    %v449 = vunpack.c.l.b16 %v410
    %v450 = vunpack.c.l.b16 %v411
    %v451 = vunpack.c.l.b16 %v412
    %v452 = vunpack.c.l.b16 %v413
    %v453 = vunpack.c.l.b16 %v414
    %v454 = vunpack.c.l.b16 %v415
    %v455 = vunpack.c.l.b16 %v416
    %v456 = vunpack.c.l.b16 %v417
    %v457 = vunpack.c.l.b16 %v418
    %v458 = vunpack.c.l.b16 %v419
    %v459 = vunpack.c.l.b16 %v420
    %v460 = vunpack.c.l.b16 %v421
    %v461 = vpack.c.b16 %v446, %v445
    %v462 = vpack.c.b16 %v448, %v447
    %v463 = vpack.c.b16 %v450, %v449
    %v464 = vpack.c.b16 %v452, %v451
    %v465 = vpack.c.b16 %v454, %v453
    %v466 = vpack.c.b16 %v456, %v455
    %v467 = vpack.c.b16 %v458, %v457
    %v468 = vpack.c.b16 %v460, %v459
    %477 = vmatprep.subr.bf16.mxu0 0
    %478 = vmatpush1.bf16.msra.mxu0 %v461
    %479 = vmatprep.subr.bf16.mxu0 0
    %480 = vmatpush1.bf16.msra.mxu0 %v462
    %481 = vmatprep.subr.bf16.mxu0 0
    %482 = vmatpush1.bf16.msra.mxu0 %v463
    %483 = vmatprep.subr.bf16.mxu0 0
    %484 = vmatpush1.bf16.msra.mxu0 %v464
    %485 = vmatprep.subr.bf16.mxu0 0
    %486 = vmatpush1.bf16.msra.mxu0 %v465
    %487 = vmatprep.subr.bf16.mxu0 0
    %488 = vmatpush1.bf16.msra.mxu0 %v466
    %489 = vmatprep.subr.bf16.mxu0 0
    %490 = vmatpush1.bf16.msra.mxu0 %v467
    %491 = vmatprep.subr.bf16.mxu0 0
    %492 = vmatpush1.bf16.msra.mxu0 %v468
    %493 = vmatprep.subr.bf16.mxu0 0
    %494 = vmatpush1.bf16.msra.mxu0 0
    %495 = vmatprep.subr.bf16.mxu0 0
    %496 = vmatpush1.bf16.msra.mxu0 0
    %497 = vmatprep.subr.bf16.mxu0 0
    %498 = vmatpush1.bf16.msra.mxu0 0
    %499 = vmatprep.subr.bf16.mxu0 0
    %500 = vmatpush1.bf16.msra.mxu0 0
    %501 = vmatprep.subr.bf16.mxu0 0
    %502 = vmatpush1.bf16.msra.mxu0 0
    %503 = vmatprep.subr.bf16.mxu0 0
    %504 = vmatpush1.bf16.msra.mxu0 0
    %505 = vmatprep.subr.bf16.mxu0 0
    %506 = vmatpush1.bf16.msra.mxu0 0
    %507 = vmatprep.subr.bf16.mxu0 0
    %508 = vmatpush1.bf16.msra.mxu0 0
    %509 = vmatprep.mubr.bf16.mxu0 0
    %510 = vmatmul.mubr.bf16.gmra.mrb[0].mxu0 %v402
    %v511 = vpop.f32.mrb[0].mxu0
    %v512 = vadd.f32 %v427, %v511
    %v513 = vpop.f32.mrb[0].mxu0
    %v514 = vpop.f32.mrb[0].mxu0
    %v515 = vadd.f32 %v427, %v514
    %v516 = vpop.f32.mrb[0].mxu0
    %517 = vmatprep.mubr.bf16.mxu0 0
    %518 = vmatmul.mubr.bf16.gmra.mrb[0].mxu0 %v403
    %v519 = vpop.f32.mrb[0].mxu0
    %v520 = vadd.f32 %v427, %v519
    %v521 = vpop.f32.mrb[0].mxu0
    %v522 = vpop.f32.mrb[0].mxu0
    %v523 = vadd.f32 %v427, %v522
    %v524 = vpop.f32.mrb[0].mxu0
    %525 = vmatprep.mubr.bf16.mxu0 0
    %526 = vmatmul.mubr.bf16.gmra.mrb[0].mxu0 %v404
    %v527 = vpop.f32.mrb[0].mxu0
    %v528 = vadd.f32 %v427, %v527
    %v529 = vpop.f32.mrb[0].mxu0
    %v530 = vpop.f32.mrb[0].mxu0
    %v531 = vadd.f32 %v427, %v530
    %v532 = vpop.f32.mrb[0].mxu0
    %533 = vmatprep.mubr.bf16.mxu0 0
    %534 = vmatmul.mubr.bf16.gmra.mrb[0].mxu0 %v405
    %v535 = vpop.f32.mrb[0].mxu0
    %v536 = vadd.f32 %v427, %v535
    %v537 = vpop.f32.mrb[0].mxu0
    %v538 = vpop.f32.mrb[0].mxu0
    %v539 = vadd.f32 %v427, %v538
    %v540 = vpop.f32.mrb[0].mxu0
    %541 = vdwg.mxu0
    %v542 = vmul.f32 %v512, 0.5
    %v543 = vmul.f32 %v515, 0.5
    %v544 = vmul.f32 %v520, 0.5
    %v545 = vmul.f32 %v523, 0.5
    %v546 = vmul.f32 %v528, 0.5
    %v547 = vmul.f32 %v531, 0.5
    %v548 = vmul.f32 %v536, 0.5
    %v549 = vmul.f32 %v539, 0.5
    %v550 = vmul.f32 %v512, 0.70710677
    %v551 = vmul.f32 %v515, 0.70710677
    %v552 = vmul.f32 %v520, 0.70710677
    %v553 = vmul.f32 %v523, 0.70710677
    %v554 = vmul.f32 %v528, 0.70710677
    %v555 = vmul.f32 %v531, 0.70710677
    %v556 = vmul.f32 %v536, 0.70710677
    %v557 = vmul.f32 %v539, 0.70710677
    %v558 = vand.u32 2147483647, %v550
    %v559 = vand.u32 2147483647, %v551
    %v560 = vand.u32 2147483647, %v552
    %v561 = vand.u32 2147483647, %v553
    %v562 = vand.u32 2147483647, %v554
    %v563 = vand.u32 2147483647, %v555
    %v564 = vand.u32 2147483647, %v556
    %v565 = vand.u32 2147483647, %v557
    %v566 = vmul.f32 %v558, 0.3275911
    %v567 = vmul.f32 %v559, 0.3275911
    %v568 = vmul.f32 %v560, 0.3275911
    %v569 = vmul.f32 %v561, 0.3275911
    %v570 = vmul.f32 %v562, 0.3275911
    %v571 = vmul.f32 %v563, 0.3275911
    %v572 = vmul.f32 %v564, 0.3275911
    %v573 = vmul.f32 %v565, 0.3275911
    %v574 = vadd.f32 %v566, 1.0
    %v575 = vadd.f32 %v567, 1.0
    %v576 = vadd.f32 %v568, 1.0
    %v577 = vadd.f32 %v569, 1.0
    %v578 = vadd.f32 %v570, 1.0
    %v579 = vadd.f32 %v571, 1.0
    %v580 = vadd.f32 %v572, 1.0
    %v581 = vadd.f32 %v573, 1.0
    %v582 = vrcp.pop %v574
    %v583 = vmul.f32 1.0, %v582
    %v584 = vrcp.pop %v575
    %v585 = vmul.f32 1.0, %v584
    %v586 = vrcp.pop %v576
    %v587 = vmul.f32 1.0, %v586
    %v588 = vrcp.pop %v577
    %v589 = vmul.f32 1.0, %v588
    %v590 = vrcp.pop %v578
    %v591 = vmul.f32 1.0, %v590
    %v592 = vrcp.pop %v579
    %v593 = vmul.f32 1.0, %v592
    %v594 = vrcp.pop %v580
    %v595 = vmul.f32 1.0, %v594
    %v596 = vrcp.pop %v581
    %v597 = vmul.f32 1.0, %v596
    %v598 = vmul.f32 %v583, 1.0614054
    %v599 = vmul.f32 %v585, 1.0614054
    %v600 = vmul.f32 %v587, 1.0614054
    %v601 = vmul.f32 %v589, 1.0614054
    %v602 = vmul.f32 %v591, 1.0614054
    %v603 = vmul.f32 %v593, 1.0614054
    %v604 = vmul.f32 %v595, 1.0614054
    %v605 = vmul.f32 %v597, 1.0614054
    %v606 = vadd.f32 %v598, -1.4531521
    %v607 = vadd.f32 %v599, -1.4531521
    %v608 = vadd.f32 %v600, -1.4531521
    %v609 = vadd.f32 %v601, -1.4531521
    %v610 = vadd.f32 %v602, -1.4531521
    %v611 = vadd.f32 %v603, -1.4531521
    %v612 = vadd.f32 %v604, -1.4531521
    %v613 = vadd.f32 %v605, -1.4531521
    %v614 = vmul.f32 %v606, %v583
    %v615 = vmul.f32 %v607, %v585
    %v616 = vmul.f32 %v608, %v587
    %v617 = vmul.f32 %v609, %v589
    %v618 = vmul.f32 %v610, %v591
    %v619 = vmul.f32 %v611, %v593
    %v620 = vmul.f32 %v612, %v595
    %v621 = vmul.f32 %v613, %v597
    %v622 = vadd.f32 %v614, 1.4214138
    %v623 = vadd.f32 %v615, 1.4214138
    %v624 = vadd.f32 %v616, 1.4214138
    %v625 = vadd.f32 %v617, 1.4214138
    %v626 = vadd.f32 %v618, 1.4214138
    %v627 = vadd.f32 %v619, 1.4214138
    %v628 = vadd.f32 %v620, 1.4214138
    %v629 = vadd.f32 %v621, 1.4214138
    %v630 = vmul.f32 %v622, %v583
    %v631 = vmul.f32 %v623, %v585
    %v632 = vmul.f32 %v624, %v587
    %v633 = vmul.f32 %v625, %v589
    %v634 = vmul.f32 %v626, %v591
    %v635 = vmul.f32 %v627, %v593
    %v636 = vmul.f32 %v628, %v595
    %v637 = vmul.f32 %v629, %v597
    %v638 = vadd.f32 %v630, -0.28449672
    %v639 = vadd.f32 %v631, -0.28449672
    %v640 = vadd.f32 %v632, -0.28449672
    %v641 = vadd.f32 %v633, -0.28449672
    %v642 = vadd.f32 %v634, -0.28449672
    %v643 = vadd.f32 %v635, -0.28449672
    %v644 = vadd.f32 %v636, -0.28449672
    %v645 = vadd.f32 %v637, -0.28449672
    %v646 = vmul.f32 %v638, %v583
    %v647 = vmul.f32 %v639, %v585
    %v648 = vmul.f32 %v640, %v587
    %v649 = vmul.f32 %v641, %v589
    %v650 = vmul.f32 %v642, %v591
    %v651 = vmul.f32 %v643, %v593
    %v652 = vmul.f32 %v644, %v595
    %v653 = vmul.f32 %v645, %v597
    %v654 = vadd.f32 %v646, 0.2548296
    %v655 = vadd.f32 %v647, 0.2548296
    %v656 = vadd.f32 %v648, 0.2548296
    %v657 = vadd.f32 %v649, 0.2548296
    %v658 = vadd.f32 %v650, 0.2548296
    %v659 = vadd.f32 %v651, 0.2548296
    %v660 = vadd.f32 %v652, 0.2548296
    %v661 = vadd.f32 %v653, 0.2548296
    %v662 = vmul.f32 %v654, %v583
    %v663 = vmul.f32 %v655, %v585
    %v664 = vmul.f32 %v656, %v587
    %v665 = vmul.f32 %v657, %v589
    %v666 = vmul.f32 %v658, %v591
    %v667 = vmul.f32 %v659, %v593
    %v668 = vmul.f32 %v660, %v595
    %v669 = vmul.f32 %v661, %v597
    %v670 = vsub.f32 0.0, %v558
    %v671 = vsub.f32 0.0, %v559
    %v672 = vsub.f32 0.0, %v560
    %v673 = vsub.f32 0.0, %v561
    %v674 = vsub.f32 0.0, %v562
    %v675 = vsub.f32 0.0, %v563
    %v676 = vsub.f32 0.0, %v564
    %v677 = vsub.f32 0.0, %v565
    %v678 = vmul.f32 %v670, %v558
    %v679 = vmul.f32 %v671, %v559
    %v680 = vmul.f32 %v672, %v560
    %v681 = vmul.f32 %v673, %v561
    %v682 = vmul.f32 %v674, %v562
    %v683 = vmul.f32 %v675, %v563
    %v684 = vmul.f32 %v676, %v564
    %v685 = vmul.f32 %v677, %v565
    %v686 = vmul.f32 %v678, 1.442695
    %v687 = vpow.pop %v686
    %v688 = vmul.f32 %v679, 1.442695
    %v689 = vpow.pop %v688
    %v690 = vmul.f32 %v680, 1.442695
    %v691 = vpow.pop %v690
    %v692 = vmul.f32 %v681, 1.442695
    %v693 = vpow.pop %v692
    %v694 = vmul.f32 %v682, 1.442695
    %v695 = vpow.pop %v694
    %v696 = vmul.f32 %v683, 1.442695
    %v697 = vpow.pop %v696
    %v698 = vmul.f32 %v684, 1.442695
    %v699 = vpow.pop %v698
    %v700 = vmul.f32 %v685, 1.442695
    %v701 = vpow.pop %v700
    %v702 = vmul.f32 %v662, %v687
    %v703 = vmul.f32 %v663, %v689
    %v704 = vmul.f32 %v664, %v691
    %v705 = vmul.f32 %v665, %v693
    %v706 = vmul.f32 %v666, %v695
    %v707 = vmul.f32 %v667, %v697
    %v708 = vmul.f32 %v668, %v699
    %v709 = vmul.f32 %v669, %v701
    %v710 = vsub.f32 1.0, %v702
    %v711 = vsub.f32 1.0, %v703
    %v712 = vsub.f32 1.0, %v704
    %v713 = vsub.f32 1.0, %v705
    %v714 = vsub.f32 1.0, %v706
    %v715 = vsub.f32 1.0, %v707
    %v716 = vsub.f32 1.0, %v708
    %v717 = vsub.f32 1.0, %v709
    %vm718 = vcmp.ge.f32.partialorder %v550, 0.0
    %vm719 = vcmp.ge.f32.partialorder %v551, 0.0
    %vm720 = vcmp.ge.f32.partialorder %v552, 0.0
    %vm721 = vcmp.ge.f32.partialorder %v553, 0.0
    %vm722 = vcmp.ge.f32.partialorder %v554, 0.0
    %vm723 = vcmp.ge.f32.partialorder %v555, 0.0
    %vm724 = vcmp.ge.f32.partialorder %v556, 0.0
    %vm725 = vcmp.ge.f32.partialorder %v557, 0.0
    %v726 = vsub.f32 0.0, %v710
    %v727 = vsub.f32 0.0, %v711
    %v728 = vsub.f32 0.0, %v712
    %v729 = vsub.f32 0.0, %v713
    %v730 = vsub.f32 0.0, %v714
    %v731 = vsub.f32 0.0, %v715
    %v732 = vsub.f32 0.0, %v716
    %v733 = vsub.f32 0.0, %v717
    %v734 = vsel %vm718, %v710, %v726
    %v735 = vsel %vm719, %v711, %v727
    %v736 = vsel %vm720, %v712, %v728
    %v737 = vsel %vm721, %v713, %v729
    %v738 = vsel %vm722, %v714, %v730
    %v739 = vsel %vm723, %v715, %v731
    %v740 = vsel %vm724, %v716, %v732
    %v741 = vsel %vm725, %v717, %v733
    %v742 = vadd.f32 %v734, 1.0
    %v743 = vadd.f32 %v735, 1.0
    %v744 = vadd.f32 %v736, 1.0
    %v745 = vadd.f32 %v737, 1.0
    %v746 = vadd.f32 %v738, 1.0
    %v747 = vadd.f32 %v739, 1.0
    %v748 = vadd.f32 %v740, 1.0
    %v749 = vadd.f32 %v741, 1.0
    %v750 = vmul.f32 %v542, %v742
    %v751 = vmul.f32 %v543, %v743
    %v752 = vmul.f32 %v544, %v744
    %v753 = vmul.f32 %v545, %v745
    %v754 = vmul.f32 %v546, %v746
    %v755 = vmul.f32 %v547, %v747
    %v756 = vmul.f32 %v548, %v748
    %v757 = vmul.f32 %v549, %v749
    %v758 = vpack.c.bf16 %v751, %v750
    %v759 = vpack.c.bf16 %v753, %v752
    %v760 = vpack.c.bf16 %v755, %v754
    %v761 = vpack.c.bf16 %v757, %v756
    %s762 = scalar_lea.vmem [#allocation2], 64
    %v763 = vld [vmem:[%s762] sm:$0xf]
    %v764 = vld [vmem:[%s762 + $0x4] sm:$0xf]
    %v765 = vld [vmem:[%s762 + $0x8] sm:$0xf]
    %v766 = vld [vmem:[%s762 + $0xc] sm:$0xf]
    %v767 = vld [vmem:[%s762 + $0x10] sm:$0xf]
    %v768 = vld [vmem:[%s762 + $0x14] sm:$0xf]
    %v769 = vld [vmem:[%s762 + $0x18] sm:$0xf]
    %v770 = vld [vmem:[%s762 + $0x1c] sm:$0xf]
    %v771 = vld [vmem:[%s762 + $0x20] sm:$0xf]
    %v772 = vld [vmem:[%s762 + $0x24] sm:$0xf]
    %v773 = vld [vmem:[%s762 + $0x28] sm:$0xf]
    %v774 = vld [vmem:[%s762 + $0x2c] sm:$0xf]
    %v775 = vld [vmem:[%s762 + $0x30] sm:$0xf]
    %v776 = vld [vmem:[%s762 + $0x34] sm:$0xf]
    %v777 = vld [vmem:[%s762 + $0x38] sm:$0xf]
    %v778 = vld [vmem:[%s762 + $0x3c] sm:$0xf]
    %s779 = scalar_lea.vmem %s5, 1
    %v780 = vld [vmem:[%s779] sm:$0x1]
    %v782 = vlaneseq
    %v783 = vshrl.u32 %v782, 7
    %v784 = vsub.s32 0, %v783
    %v785 = vrot.slane %v780, %v784
    %v803 = vunpack.c.l.b16 %v763
    %v804 = vunpack.c.l.b16 %v764
    %v805 = vunpack.c.l.b16 %v765
    %v806 = vunpack.c.l.b16 %v766
    %v807 = vunpack.c.l.b16 %v767
    %v808 = vunpack.c.l.b16 %v768
    %v809 = vunpack.c.l.b16 %v769
    %v810 = vunpack.c.l.b16 %v770
    %v811 = vunpack.c.l.b16 %v771
    %v812 = vunpack.c.l.b16 %v772
    %v813 = vunpack.c.l.b16 %v773
    %v814 = vunpack.c.l.b16 %v774
    %v815 = vunpack.c.l.b16 %v775
    %v816 = vunpack.c.l.b16 %v776
    %v817 = vunpack.c.l.b16 %v777
    %v818 = vunpack.c.l.b16 %v778
    %v819 = vpack.c.b16 %v804, %v803
    %v820 = vpack.c.b16 %v806, %v805
    %v821 = vpack.c.b16 %v808, %v807
    %v822 = vpack.c.b16 %v810, %v809
    %v823 = vpack.c.b16 %v812, %v811
    %v824 = vpack.c.b16 %v814, %v813
    %v825 = vpack.c.b16 %v816, %v815
    %v826 = vpack.c.b16 %v818, %v817
    %835 = vmatprep.subr.bf16.mxu0 0
    %836 = vmatpush1.bf16.msra.mxu0 %v819
    %837 = vmatprep.subr.bf16.mxu0 0
    %838 = vmatpush1.bf16.msra.mxu0 %v820
    %839 = vmatprep.subr.bf16.mxu0 0
    %840 = vmatpush1.bf16.msra.mxu0 %v821
    %841 = vmatprep.subr.bf16.mxu0 0
    %842 = vmatpush1.bf16.msra.mxu0 %v822
    %843 = vmatprep.subr.bf16.mxu0 0
    %844 = vmatpush1.bf16.msra.mxu0 %v823
    %845 = vmatprep.subr.bf16.mxu0 0
    %846 = vmatpush1.bf16.msra.mxu0 %v824
    %847 = vmatprep.subr.bf16.mxu0 0
    %848 = vmatpush1.bf16.msra.mxu0 %v825
    %849 = vmatprep.subr.bf16.mxu0 0
    %850 = vmatpush1.bf16.msra.mxu0 %v826
    %851 = vmatprep.subr.bf16.mxu0 0
    %852 = vmatpush1.bf16.msra.mxu0 0
    %853 = vmatprep.subr.bf16.mxu0 0
    %854 = vmatpush1.bf16.msra.mxu0 0
    %855 = vmatprep.subr.bf16.mxu0 0
    %856 = vmatpush1.bf16.msra.mxu0 0
    %857 = vmatprep.subr.bf16.mxu0 0
    %858 = vmatpush1.bf16.msra.mxu0 0
    %859 = vmatprep.subr.bf16.mxu0 0
    %860 = vmatpush1.bf16.msra.mxu0 0
    %861 = vmatprep.subr.bf16.mxu0 0
    %862 = vmatpush1.bf16.msra.mxu0 0
    %863 = vmatprep.subr.bf16.mxu0 0
    %864 = vmatpush1.bf16.msra.mxu0 0
    %865 = vmatprep.subr.bf16.mxu0 0
    %866 = vmatpush1.bf16.msra.mxu0 0
    %867 = vmatprep.mubr.bf16.mxu0 0
    %868 = vmatmul.mubr.bf16.gmra.mrb[0].mxu0 %v758
    %v869 = vpop.f32.mrb[0].mxu0
    %v870 = vadd.f32 %v785, %v869
    %v871 = vpop.f32.mrb[0].mxu0
    %v872 = vpop.f32.mrb[0].mxu0
    %v873 = vadd.f32 %v785, %v872
    %v874 = vpop.f32.mrb[0].mxu0
    %875 = vmatprep.mubr.bf16.mxu0 0
    %876 = vmatmul.mubr.bf16.gmra.mrb[0].mxu0 %v759
    %v877 = vpop.f32.mrb[0].mxu0
    %v878 = vadd.f32 %v785, %v877
    %v879 = vpop.f32.mrb[0].mxu0
    %v880 = vpop.f32.mrb[0].mxu0
    %v881 = vadd.f32 %v785, %v880
    %v882 = vpop.f32.mrb[0].mxu0
    %883 = vmatprep.mubr.bf16.mxu0 0
    %884 = vmatmul.mubr.bf16.gmra.mrb[0].mxu0 %v760
    %v885 = vpop.f32.mrb[0].mxu0
    %v886 = vadd.f32 %v785, %v885
    %v887 = vpop.f32.mrb[0].mxu0
    %v888 = vpop.f32.mrb[0].mxu0
    %v889 = vadd.f32 %v785, %v888
    %v890 = vpop.f32.mrb[0].mxu0
    %891 = vmatprep.mubr.bf16.mxu0 0
    %892 = vmatmul.mubr.bf16.gmra.mrb[0].mxu0 %v761
    %v893 = vpop.f32.mrb[0].mxu0
    %v894 = vadd.f32 %v785, %v893
    %v895 = vpop.f32.mrb[0].mxu0
    %v896 = vpop.f32.mrb[0].mxu0
    %v897 = vadd.f32 %v785, %v896
    %v898 = vpop.f32.mrb[0].mxu0
    %899 = vdwg.mxu0
    %v900 = vmul.f32 %v870, 0.5
    %v901 = vmul.f32 %v873, 0.5
    %v902 = vmul.f32 %v878, 0.5
    %v903 = vmul.f32 %v881, 0.5
    %v904 = vmul.f32 %v886, 0.5
    %v905 = vmul.f32 %v889, 0.5
    %v906 = vmul.f32 %v894, 0.5
    %v907 = vmul.f32 %v897, 0.5
    %v908 = vmul.f32 %v870, 0.70710677
    %v909 = vmul.f32 %v873, 0.70710677
    %v910 = vmul.f32 %v878, 0.70710677
    %v911 = vmul.f32 %v881, 0.70710677
    %v912 = vmul.f32 %v886, 0.70710677
    %v913 = vmul.f32 %v889, 0.70710677
    %v914 = vmul.f32 %v894, 0.70710677
    %v915 = vmul.f32 %v897, 0.70710677
    %v916 = vand.u32 2147483647, %v908
    %v917 = vand.u32 2147483647, %v909
    %v918 = vand.u32 2147483647, %v910
    %v919 = vand.u32 2147483647, %v911
    %v920 = vand.u32 2147483647, %v912
    %v921 = vand.u32 2147483647, %v913
    %v922 = vand.u32 2147483647, %v914
    %v923 = vand.u32 2147483647, %v915
    %v924 = vmul.f32 %v916, 0.3275911
    %v925 = vmul.f32 %v917, 0.3275911
    %v926 = vmul.f32 %v918, 0.3275911
    %v927 = vmul.f32 %v919, 0.3275911
    %v928 = vmul.f32 %v920, 0.3275911
    %v929 = vmul.f32 %v921, 0.3275911
    %v930 = vmul.f32 %v922, 0.3275911
    %v931 = vmul.f32 %v923, 0.3275911
    %v932 = vadd.f32 %v924, 1.0
    %v933 = vadd.f32 %v925, 1.0
    %v934 = vadd.f32 %v926, 1.0
    %v935 = vadd.f32 %v927, 1.0
    %v936 = vadd.f32 %v928, 1.0
    %v937 = vadd.f32 %v929, 1.0
    %v938 = vadd.f32 %v930, 1.0
    %v939 = vadd.f32 %v931, 1.0
    %v940 = vrcp.pop %v932
    %v941 = vmul.f32 1.0, %v940
    %v942 = vrcp.pop %v933
    %v943 = vmul.f32 1.0, %v942
    %v944 = vrcp.pop %v934
    %v945 = vmul.f32 1.0, %v944
    %v946 = vrcp.pop %v935
    %v947 = vmul.f32 1.0, %v946
    %v948 = vrcp.pop %v936
    %v949 = vmul.f32 1.0, %v948
    %v950 = vrcp.pop %v937
    %v951 = vmul.f32 1.0, %v950
    %v952 = vrcp.pop %v938
    %v953 = vmul.f32 1.0, %v952
    %v954 = vrcp.pop %v939
    %v955 = vmul.f32 1.0, %v954
    %v956 = vmul.f32 %v941, 1.0614054
    %v957 = vmul.f32 %v943, 1.0614054
    %v958 = vmul.f32 %v945, 1.0614054
    %v959 = vmul.f32 %v947, 1.0614054
    %v960 = vmul.f32 %v949, 1.0614054
    %v961 = vmul.f32 %v951, 1.0614054
    %v962 = vmul.f32 %v953, 1.0614054
    %v963 = vmul.f32 %v955, 1.0614054
    %v964 = vadd.f32 %v956, -1.4531521
    %v965 = vadd.f32 %v957, -1.4531521
    %v966 = vadd.f32 %v958, -1.4531521
    %v967 = vadd.f32 %v959, -1.4531521
    %v968 = vadd.f32 %v960, -1.4531521
    %v969 = vadd.f32 %v961, -1.4531521
    %v970 = vadd.f32 %v962, -1.4531521
    %v971 = vadd.f32 %v963, -1.4531521
    %v972 = vmul.f32 %v964, %v941
    %v973 = vmul.f32 %v965, %v943
    %v974 = vmul.f32 %v966, %v945
    %v975 = vmul.f32 %v967, %v947
    %v976 = vmul.f32 %v968, %v949
    %v977 = vmul.f32 %v969, %v951
    %v978 = vmul.f32 %v970, %v953
    %v979 = vmul.f32 %v971, %v955
    %v980 = vadd.f32 %v972, 1.4214138
    %v981 = vadd.f32 %v973, 1.4214138
    %v982 = vadd.f32 %v974, 1.4214138
    %v983 = vadd.f32 %v975, 1.4214138
    %v984 = vadd.f32 %v976, 1.4214138
    %v985 = vadd.f32 %v977, 1.4214138
    %v986 = vadd.f32 %v978, 1.4214138
    %v987 = vadd.f32 %v979, 1.4214138
    %v988 = vmul.f32 %v980, %v941
    %v989 = vmul.f32 %v981, %v943
    %v990 = vmul.f32 %v982, %v945
    %v991 = vmul.f32 %v983, %v947
    %v992 = vmul.f32 %v984, %v949
    %v993 = vmul.f32 %v985, %v951
    %v994 = vmul.f32 %v986, %v953
    %v995 = vmul.f32 %v987, %v955
    %v996 = vadd.f32 %v988, -0.28449672
    %v997 = vadd.f32 %v989, -0.28449672
    %v998 = vadd.f32 %v990, -0.28449672
    %v999 = vadd.f32 %v991, -0.28449672
    %v1000 = vadd.f32 %v992, -0.28449672
    %v1001 = vadd.f32 %v993, -0.28449672
    %v1002 = vadd.f32 %v994, -0.28449672
    %v1003 = vadd.f32 %v995, -0.28449672
    %v1004 = vmul.f32 %v996, %v941
    %v1005 = vmul.f32 %v997, %v943
    %v1006 = vmul.f32 %v998, %v945
    %v1007 = vmul.f32 %v999, %v947
    %v1008 = vmul.f32 %v1000, %v949
    %v1009 = vmul.f32 %v1001, %v951
    %v1010 = vmul.f32 %v1002, %v953
    %v1011 = vmul.f32 %v1003, %v955
    %v1012 = vadd.f32 %v1004, 0.2548296
    %v1013 = vadd.f32 %v1005, 0.2548296
    %v1014 = vadd.f32 %v1006, 0.2548296
    %v1015 = vadd.f32 %v1007, 0.2548296
    %v1016 = vadd.f32 %v1008, 0.2548296
    %v1017 = vadd.f32 %v1009, 0.2548296
    %v1018 = vadd.f32 %v1010, 0.2548296
    %v1019 = vadd.f32 %v1011, 0.2548296
    %v1020 = vmul.f32 %v1012, %v941
    %v1021 = vmul.f32 %v1013, %v943
    %v1022 = vmul.f32 %v1014, %v945
    %v1023 = vmul.f32 %v1015, %v947
    %v1024 = vmul.f32 %v1016, %v949
    %v1025 = vmul.f32 %v1017, %v951
    %v1026 = vmul.f32 %v1018, %v953
    %v1027 = vmul.f32 %v1019, %v955
    %v1028 = vsub.f32 0.0, %v916
    %v1029 = vsub.f32 0.0, %v917
    %v1030 = vsub.f32 0.0, %v918
    %v1031 = vsub.f32 0.0, %v919
    %v1032 = vsub.f32 0.0, %v920
    %v1033 = vsub.f32 0.0, %v921
    %v1034 = vsub.f32 0.0, %v922
    %v1035 = vsub.f32 0.0, %v923
    %v1036 = vmul.f32 %v1028, %v916
    %v1037 = vmul.f32 %v1029, %v917
    %v1038 = vmul.f32 %v1030, %v918
    %v1039 = vmul.f32 %v1031, %v919
    %v1040 = vmul.f32 %v1032, %v920
    %v1041 = vmul.f32 %v1033, %v921
    %v1042 = vmul.f32 %v1034, %v922
    %v1043 = vmul.f32 %v1035, %v923
    %v1044 = vmul.f32 %v1036, 1.442695
    %v1045 = vpow.pop %v1044
    %v1046 = vmul.f32 %v1037, 1.442695
    %v1047 = vpow.pop %v1046
    %v1048 = vmul.f32 %v1038, 1.442695
    %v1049 = vpow.pop %v1048
    %v1050 = vmul.f32 %v1039, 1.442695
    %v1051 = vpow.pop %v1050
    %v1052 = vmul.f32 %v1040, 1.442695
    %v1053 = vpow.pop %v1052
    %v1054 = vmul.f32 %v1041, 1.442695
    %v1055 = vpow.pop %v1054
    %v1056 = vmul.f32 %v1042, 1.442695
    %v1057 = vpow.pop %v1056
    %v1058 = vmul.f32 %v1043, 1.442695
    %v1059 = vpow.pop %v1058
    %v1060 = vmul.f32 %v1020, %v1045
    %v1061 = vmul.f32 %v1021, %v1047
    %v1062 = vmul.f32 %v1022, %v1049
    %v1063 = vmul.f32 %v1023, %v1051
    %v1064 = vmul.f32 %v1024, %v1053
    %v1065 = vmul.f32 %v1025, %v1055
    %v1066 = vmul.f32 %v1026, %v1057
    %v1067 = vmul.f32 %v1027, %v1059
    %v1068 = vsub.f32 1.0, %v1060
    %v1069 = vsub.f32 1.0, %v1061
    %v1070 = vsub.f32 1.0, %v1062
    %v1071 = vsub.f32 1.0, %v1063
    %v1072 = vsub.f32 1.0, %v1064
    %v1073 = vsub.f32 1.0, %v1065
    %v1074 = vsub.f32 1.0, %v1066
    %v1075 = vsub.f32 1.0, %v1067
    %vm1076 = vcmp.ge.f32.partialorder %v908, 0.0
    %vm1077 = vcmp.ge.f32.partialorder %v909, 0.0
    %vm1078 = vcmp.ge.f32.partialorder %v910, 0.0
    %vm1079 = vcmp.ge.f32.partialorder %v911, 0.0
    %vm1080 = vcmp.ge.f32.partialorder %v912, 0.0
    %vm1081 = vcmp.ge.f32.partialorder %v913, 0.0
    %vm1082 = vcmp.ge.f32.partialorder %v914, 0.0
    %vm1083 = vcmp.ge.f32.partialorder %v915, 0.0
    %v1084 = vsub.f32 0.0, %v1068
    %v1085 = vsub.f32 0.0, %v1069
    %v1086 = vsub.f32 0.0, %v1070
    %v1087 = vsub.f32 0.0, %v1071
    %v1088 = vsub.f32 0.0, %v1072
    %v1089 = vsub.f32 0.0, %v1073
    %v1090 = vsub.f32 0.0, %v1074
    %v1091 = vsub.f32 0.0, %v1075
    %v1092 = vsel %vm1076, %v1068, %v1084
    %v1093 = vsel %vm1077, %v1069, %v1085
    %v1094 = vsel %vm1078, %v1070, %v1086
    %v1095 = vsel %vm1079, %v1071, %v1087
    %v1096 = vsel %vm1080, %v1072, %v1088
    %v1097 = vsel %vm1081, %v1073, %v1089
    %v1098 = vsel %vm1082, %v1074, %v1090
    %v1099 = vsel %vm1083, %v1075, %v1091
    %v1100 = vadd.f32 %v1092, 1.0
    %v1101 = vadd.f32 %v1093, 1.0
    %v1102 = vadd.f32 %v1094, 1.0
    %v1103 = vadd.f32 %v1095, 1.0
    %v1104 = vadd.f32 %v1096, 1.0
    %v1105 = vadd.f32 %v1097, 1.0
    %v1106 = vadd.f32 %v1098, 1.0
    %v1107 = vadd.f32 %v1099, 1.0
    %v1108 = vmul.f32 %v900, %v1100
    %v1109 = vmul.f32 %v901, %v1101
    %v1110 = vmul.f32 %v902, %v1102
    %v1111 = vmul.f32 %v903, %v1103
    %v1112 = vmul.f32 %v904, %v1104
    %v1113 = vmul.f32 %v905, %v1105
    %v1114 = vmul.f32 %v906, %v1106
    %v1115 = vmul.f32 %v907, %v1107
    %v1116 = vpack.c.bf16 %v1109, %v1108
    %v1117 = vpack.c.bf16 %v1111, %v1110
    %v1118 = vpack.c.bf16 %v1113, %v1112
    %v1119 = vpack.c.bf16 %v1115, %v1114
    %s1120 = scalar_lea.vmem [#allocation2], 128
    %v1121 = vld [vmem:[%s1120] sm:$0xf]
    %v1122 = vld [vmem:[%s1120 + $0x4] sm:$0xf]
    %v1123 = vld [vmem:[%s1120 + $0x8] sm:$0xf]
    %v1124 = vld [vmem:[%s1120 + $0xc] sm:$0xf]
    %v1125 = vld [vmem:[%s1120 + $0x10] sm:$0xf]
    %v1126 = vld [vmem:[%s1120 + $0x14] sm:$0xf]
    %v1127 = vld [vmem:[%s1120 + $0x18] sm:$0xf]
    %v1128 = vld [vmem:[%s1120 + $0x1c] sm:$0xf]
    %v1129 = vld [vmem:[%s1120 + $0x20] sm:$0xf]
    %v1130 = vld [vmem:[%s1120 + $0x24] sm:$0xf]
    %v1131 = vld [vmem:[%s1120 + $0x28] sm:$0xf]
    %v1132 = vld [vmem:[%s1120 + $0x2c] sm:$0xf]
    %v1133 = vld [vmem:[%s1120 + $0x30] sm:$0xf]
    %v1134 = vld [vmem:[%s1120 + $0x34] sm:$0xf]
    %v1135 = vld [vmem:[%s1120 + $0x38] sm:$0xf]
    %v1136 = vld [vmem:[%s1120 + $0x3c] sm:$0xf]
    %s1137 = scalar_lea.vmem %s5, 2
    %v1138 = vld [vmem:[%s1137] sm:$0x1]
    %v1140 = vlaneseq
    %v1141 = vshrl.u32 %v1140, 7
    %v1142 = vsub.s32 0, %v1141
    %v1143 = vrot.slane %v1138, %v1142
    %v1161 = vunpack.c.l.b16 %v1121
    %v1162 = vunpack.c.l.b16 %v1122
    %v1163 = vunpack.c.l.b16 %v1123
    %v1164 = vunpack.c.l.b16 %v1124
    %v1165 = vunpack.c.l.b16 %v1125
    %v1166 = vunpack.c.l.b16 %v1126
    %v1167 = vunpack.c.l.b16 %v1127
    %v1168 = vunpack.c.l.b16 %v1128
    %v1169 = vunpack.c.l.b16 %v1129
    %v1170 = vunpack.c.l.b16 %v1130
    %v1171 = vunpack.c.l.b16 %v1131
    %v1172 = vunpack.c.l.b16 %v1132
    %v1173 = vunpack.c.l.b16 %v1133
    %v1174 = vunpack.c.l.b16 %v1134
    %v1175 = vunpack.c.l.b16 %v1135
    %v1176 = vunpack.c.l.b16 %v1136
    %v1177 = vpack.c.b16 %v1162, %v1161
    %v1178 = vpack.c.b16 %v1164, %v1163
    %v1179 = vpack.c.b16 %v1166, %v1165
    %v1180 = vpack.c.b16 %v1168, %v1167
    %v1181 = vpack.c.b16 %v1170, %v1169
    %v1182 = vpack.c.b16 %v1172, %v1171
    %v1183 = vpack.c.b16 %v1174, %v1173
    %v1184 = vpack.c.b16 %v1176, %v1175
    %1193 = vmatprep.subr.bf16.mxu0 0
    %1194 = vmatpush1.bf16.msra.mxu0 %v1177
    %1195 = vmatprep.subr.bf16.mxu0 0
    %1196 = vmatpush1.bf16.msra.mxu0 %v1178
    %1197 = vmatprep.subr.bf16.mxu0 0
    %1198 = vmatpush1.bf16.msra.mxu0 %v1179
    %1199 = vmatprep.subr.bf16.mxu0 0
    %1200 = vmatpush1.bf16.msra.mxu0 %v1180
    %1201 = vmatprep.subr.bf16.mxu0 0
    %1202 = vmatpush1.bf16.msra.mxu0 %v1181
    %1203 = vmatprep.subr.bf16.mxu0 0
    %1204 = vmatpush1.bf16.msra.mxu0 %v1182
    %1205 = vmatprep.subr.bf16.mxu0 0
    %1206 = vmatpush1.bf16.msra.mxu0 %v1183
    %1207 = vmatprep.subr.bf16.mxu0 0
    %1208 = vmatpush1.bf16.msra.mxu0 %v1184
    %1209 = vmatprep.subr.bf16.mxu0 0
    %1210 = vmatpush1.bf16.msra.mxu0 0
    %1211 = vmatprep.subr.bf16.mxu0 0
    %1212 = vmatpush1.bf16.msra.mxu0 0
    %1213 = vmatprep.subr.bf16.mxu0 0
    %1214 = vmatpush1.bf16.msra.mxu0 0
    %1215 = vmatprep.subr.bf16.mxu0 0
    %1216 = vmatpush1.bf16.msra.mxu0 0
    %1217 = vmatprep.subr.bf16.mxu0 0
    %1218 = vmatpush1.bf16.msra.mxu0 0
    %1219 = vmatprep.subr.bf16.mxu0 0
    %1220 = vmatpush1.bf16.msra.mxu0 0
    %1221 = vmatprep.subr.bf16.mxu0 0
    %1222 = vmatpush1.bf16.msra.mxu0 0
    %1223 = vmatprep.subr.bf16.mxu0 0
    %1224 = vmatpush1.bf16.msra.mxu0 0
    %1225 = vmatprep.mubr.bf16.mxu0 0
    %1226 = vmatmul.mubr.bf16.gmra.mrb[0].mxu0 %v1116
    %v1227 = vpop.f32.mrb[0].mxu0
    %v1228 = vadd.f32 %v1143, %v1227
    %v1229 = vpop.f32.mrb[0].mxu0
    %v1230 = vpop.f32.mrb[0].mxu0
    %v1231 = vadd.f32 %v1143, %v1230
    %v1232 = vpop.f32.mrb[0].mxu0
    %1233 = vmatprep.mubr.bf16.mxu0 0
    %1234 = vmatmul.mubr.bf16.gmra.mrb[0].mxu0 %v1117
    %v1235 = vpop.f32.mrb[0].mxu0
    %v1236 = vadd.f32 %v1143, %v1235
    %v1237 = vpop.f32.mrb[0].mxu0
    %v1238 = vpop.f32.mrb[0].mxu0
    %v1239 = vadd.f32 %v1143, %v1238
    %v1240 = vpop.f32.mrb[0].mxu0
    %1241 = vmatprep.mubr.bf16.mxu0 0
    %1242 = vmatmul.mubr.bf16.gmra.mrb[0].mxu0 %v1118
    %v1243 = vpop.f32.mrb[0].mxu0
    %v1244 = vadd.f32 %v1143, %v1243
    %v1245 = vpop.f32.mrb[0].mxu0
    %v1246 = vpop.f32.mrb[0].mxu0
    %v1247 = vadd.f32 %v1143, %v1246
    %v1248 = vpop.f32.mrb[0].mxu0
    %1249 = vmatprep.mubr.bf16.mxu0 0
    %1250 = vmatmul.mubr.bf16.gmra.mrb[0].mxu0 %v1119
    %v1251 = vpop.f32.mrb[0].mxu0
    %v1252 = vadd.f32 %v1143, %v1251
    %v1253 = vpop.f32.mrb[0].mxu0
    %v1254 = vpop.f32.mrb[0].mxu0
    %v1255 = vadd.f32 %v1143, %v1254
    %v1256 = vpop.f32.mrb[0].mxu0
    %1257 = vdwg.mxu0
    %v1258 = vmul.f32 %v1228, 0.5
    %v1259 = vmul.f32 %v1231, 0.5
    %v1260 = vmul.f32 %v1236, 0.5
    %v1261 = vmul.f32 %v1239, 0.5
    %v1262 = vmul.f32 %v1244, 0.5
    %v1263 = vmul.f32 %v1247, 0.5
    %v1264 = vmul.f32 %v1252, 0.5
    %v1265 = vmul.f32 %v1255, 0.5
    %v1266 = vmul.f32 %v1228, 0.70710677
    %v1267 = vmul.f32 %v1231, 0.70710677
    %v1268 = vmul.f32 %v1236, 0.70710677
    %v1269 = vmul.f32 %v1239, 0.70710677
    %v1270 = vmul.f32 %v1244, 0.70710677
    %v1271 = vmul.f32 %v1247, 0.70710677
    %v1272 = vmul.f32 %v1252, 0.70710677
    %v1273 = vmul.f32 %v1255, 0.70710677
    %v1274 = vand.u32 2147483647, %v1266
    %v1275 = vand.u32 2147483647, %v1267
    %v1276 = vand.u32 2147483647, %v1268
    %v1277 = vand.u32 2147483647, %v1269
    %v1278 = vand.u32 2147483647, %v1270
    %v1279 = vand.u32 2147483647, %v1271
    %v1280 = vand.u32 2147483647, %v1272
    %v1281 = vand.u32 2147483647, %v1273
    %v1282 = vmul.f32 %v1274, 0.3275911
    %v1283 = vmul.f32 %v1275, 0.3275911
    %v1284 = vmul.f32 %v1276, 0.3275911
    %v1285 = vmul.f32 %v1277, 0.3275911
    %v1286 = vmul.f32 %v1278, 0.3275911
    %v1287 = vmul.f32 %v1279, 0.3275911
    %v1288 = vmul.f32 %v1280, 0.3275911
    %v1289 = vmul.f32 %v1281, 0.3275911
    %v1290 = vadd.f32 %v1282, 1.0
    %v1291 = vadd.f32 %v1283, 1.0
    %v1292 = vadd.f32 %v1284, 1.0
    %v1293 = vadd.f32 %v1285, 1.0
    %v1294 = vadd.f32 %v1286, 1.0
    %v1295 = vadd.f32 %v1287, 1.0
    %v1296 = vadd.f32 %v1288, 1.0
    %v1297 = vadd.f32 %v1289, 1.0
    %v1298 = vrcp.pop %v1290
    %v1299 = vmul.f32 1.0, %v1298
    %v1300 = vrcp.pop %v1291
    %v1301 = vmul.f32 1.0, %v1300
    %v1302 = vrcp.pop %v1292
    %v1303 = vmul.f32 1.0, %v1302
    %v1304 = vrcp.pop %v1293
    %v1305 = vmul.f32 1.0, %v1304
    %v1306 = vrcp.pop %v1294
    %v1307 = vmul.f32 1.0, %v1306
    %v1308 = vrcp.pop %v1295
    %v1309 = vmul.f32 1.0, %v1308
    %v1310 = vrcp.pop %v1296
    %v1311 = vmul.f32 1.0, %v1310
    %v1312 = vrcp.pop %v1297
    %v1313 = vmul.f32 1.0, %v1312
    %v1314 = vmul.f32 %v1299, 1.0614054
    %v1315 = vmul.f32 %v1301, 1.0614054
    %v1316 = vmul.f32 %v1303, 1.0614054
    %v1317 = vmul.f32 %v1305, 1.0614054
    %v1318 = vmul.f32 %v1307, 1.0614054
    %v1319 = vmul.f32 %v1309, 1.0614054
    %v1320 = vmul.f32 %v1311, 1.0614054
    %v1321 = vmul.f32 %v1313, 1.0614054
    %v1322 = vadd.f32 %v1314, -1.4531521
    %v1323 = vadd.f32 %v1315, -1.4531521
    %v1324 = vadd.f32 %v1316, -1.4531521
    %v1325 = vadd.f32 %v1317, -1.4531521
    %v1326 = vadd.f32 %v1318, -1.4531521
    %v1327 = vadd.f32 %v1319, -1.4531521
    %v1328 = vadd.f32 %v1320, -1.4531521
    %v1329 = vadd.f32 %v1321, -1.4531521
    %v1330 = vmul.f32 %v1322, %v1299
    %v1331 = vmul.f32 %v1323, %v1301
    %v1332 = vmul.f32 %v1324, %v1303
    %v1333 = vmul.f32 %v1325, %v1305
    %v1334 = vmul.f32 %v1326, %v1307
    %v1335 = vmul.f32 %v1327, %v1309
    %v1336 = vmul.f32 %v1328, %v1311
    %v1337 = vmul.f32 %v1329, %v1313
    %v1338 = vadd.f32 %v1330, 1.4214138
    %v1339 = vadd.f32 %v1331, 1.4214138
    %v1340 = vadd.f32 %v1332, 1.4214138
    %v1341 = vadd.f32 %v1333, 1.4214138
    %v1342 = vadd.f32 %v1334, 1.4214138
    %v1343 = vadd.f32 %v1335, 1.4214138
    %v1344 = vadd.f32 %v1336, 1.4214138
    %v1345 = vadd.f32 %v1337, 1.4214138
    %v1346 = vmul.f32 %v1338, %v1299
    %v1347 = vmul.f32 %v1339, %v1301
    %v1348 = vmul.f32 %v1340, %v1303
    %v1349 = vmul.f32 %v1341, %v1305
    %v1350 = vmul.f32 %v1342, %v1307
    %v1351 = vmul.f32 %v1343, %v1309
    %v1352 = vmul.f32 %v1344, %v1311
    %v1353 = vmul.f32 %v1345, %v1313
    %v1354 = vadd.f32 %v1346, -0.28449672
    %v1355 = vadd.f32 %v1347, -0.28449672
    %v1356 = vadd.f32 %v1348, -0.28449672
    %v1357 = vadd.f32 %v1349, -0.28449672
    %v1358 = vadd.f32 %v1350, -0.28449672
    %v1359 = vadd.f32 %v1351, -0.28449672
    %v1360 = vadd.f32 %v1352, -0.28449672
    %v1361 = vadd.f32 %v1353, -0.28449672
    %v1362 = vmul.f32 %v1354, %v1299
    %v1363 = vmul.f32 %v1355, %v1301
    %v1364 = vmul.f32 %v1356, %v1303
    %v1365 = vmul.f32 %v1357, %v1305
    %v1366 = vmul.f32 %v1358, %v1307
    %v1367 = vmul.f32 %v1359, %v1309
    %v1368 = vmul.f32 %v1360, %v1311
    %v1369 = vmul.f32 %v1361, %v1313
    %v1370 = vadd.f32 %v1362, 0.2548296
    %v1371 = vadd.f32 %v1363, 0.2548296
    %v1372 = vadd.f32 %v1364, 0.2548296
    %v1373 = vadd.f32 %v1365, 0.2548296
    %v1374 = vadd.f32 %v1366, 0.2548296
    %v1375 = vadd.f32 %v1367, 0.2548296
    %v1376 = vadd.f32 %v1368, 0.2548296
    %v1377 = vadd.f32 %v1369, 0.2548296
    %v1378 = vmul.f32 %v1370, %v1299
    %v1379 = vmul.f32 %v1371, %v1301
    %v1380 = vmul.f32 %v1372, %v1303
    %v1381 = vmul.f32 %v1373, %v1305
    %v1382 = vmul.f32 %v1374, %v1307
    %v1383 = vmul.f32 %v1375, %v1309
    %v1384 = vmul.f32 %v1376, %v1311
    %v1385 = vmul.f32 %v1377, %v1313
    %v1386 = vsub.f32 0.0, %v1274
    %v1387 = vsub.f32 0.0, %v1275
    %v1388 = vsub.f32 0.0, %v1276
    %v1389 = vsub.f32 0.0, %v1277
    %v1390 = vsub.f32 0.0, %v1278
    %v1391 = vsub.f32 0.0, %v1279
    %v1392 = vsub.f32 0.0, %v1280
    %v1393 = vsub.f32 0.0, %v1281
    %v1394 = vmul.f32 %v1386, %v1274
    %v1395 = vmul.f32 %v1387, %v1275
    %v1396 = vmul.f32 %v1388, %v1276
    %v1397 = vmul.f32 %v1389, %v1277
    %v1398 = vmul.f32 %v1390, %v1278
    %v1399 = vmul.f32 %v1391, %v1279
    %v1400 = vmul.f32 %v1392, %v1280
    %v1401 = vmul.f32 %v1393, %v1281
    %v1402 = vmul.f32 %v1394, 1.442695
    %v1403 = vpow.pop %v1402
    %v1404 = vmul.f32 %v1395, 1.442695
    %v1405 = vpow.pop %v1404
    %v1406 = vmul.f32 %v1396, 1.442695
    %v1407 = vpow.pop %v1406
    %v1408 = vmul.f32 %v1397, 1.442695
    %v1409 = vpow.pop %v1408
    %v1410 = vmul.f32 %v1398, 1.442695
    %v1411 = vpow.pop %v1410
    %v1412 = vmul.f32 %v1399, 1.442695
    %v1413 = vpow.pop %v1412
    %v1414 = vmul.f32 %v1400, 1.442695
    %v1415 = vpow.pop %v1414
    %v1416 = vmul.f32 %v1401, 1.442695
    %v1417 = vpow.pop %v1416
    %v1418 = vmul.f32 %v1378, %v1403
    %v1419 = vmul.f32 %v1379, %v1405
    %v1420 = vmul.f32 %v1380, %v1407
    %v1421 = vmul.f32 %v1381, %v1409
    %v1422 = vmul.f32 %v1382, %v1411
    %v1423 = vmul.f32 %v1383, %v1413
    %v1424 = vmul.f32 %v1384, %v1415
    %v1425 = vmul.f32 %v1385, %v1417
    %v1426 = vsub.f32 1.0, %v1418
    %v1427 = vsub.f32 1.0, %v1419
    %v1428 = vsub.f32 1.0, %v1420
    %v1429 = vsub.f32 1.0, %v1421
    %v1430 = vsub.f32 1.0, %v1422
    %v1431 = vsub.f32 1.0, %v1423
    %v1432 = vsub.f32 1.0, %v1424
    %v1433 = vsub.f32 1.0, %v1425
    %vm1434 = vcmp.ge.f32.partialorder %v1266, 0.0
    %vm1435 = vcmp.ge.f32.partialorder %v1267, 0.0
    %vm1436 = vcmp.ge.f32.partialorder %v1268, 0.0
    %vm1437 = vcmp.ge.f32.partialorder %v1269, 0.0
    %vm1438 = vcmp.ge.f32.partialorder %v1270, 0.0
    %vm1439 = vcmp.ge.f32.partialorder %v1271, 0.0
    %vm1440 = vcmp.ge.f32.partialorder %v1272, 0.0
    %vm1441 = vcmp.ge.f32.partialorder %v1273, 0.0
    %v1442 = vsub.f32 0.0, %v1426
    %v1443 = vsub.f32 0.0, %v1427
    %v1444 = vsub.f32 0.0, %v1428
    %v1445 = vsub.f32 0.0, %v1429
    %v1446 = vsub.f32 0.0, %v1430
    %v1447 = vsub.f32 0.0, %v1431
    %v1448 = vsub.f32 0.0, %v1432
    %v1449 = vsub.f32 0.0, %v1433
    %v1450 = vsel %vm1434, %v1426, %v1442
    %v1451 = vsel %vm1435, %v1427, %v1443
    %v1452 = vsel %vm1436, %v1428, %v1444
    %v1453 = vsel %vm1437, %v1429, %v1445
    %v1454 = vsel %vm1438, %v1430, %v1446
    %v1455 = vsel %vm1439, %v1431, %v1447
    %v1456 = vsel %vm1440, %v1432, %v1448
    %v1457 = vsel %vm1441, %v1433, %v1449
    %v1458 = vadd.f32 %v1450, 1.0
    %v1459 = vadd.f32 %v1451, 1.0
    %v1460 = vadd.f32 %v1452, 1.0
    %v1461 = vadd.f32 %v1453, 1.0
    %v1462 = vadd.f32 %v1454, 1.0
    %v1463 = vadd.f32 %v1455, 1.0
    %v1464 = vadd.f32 %v1456, 1.0
    %v1465 = vadd.f32 %v1457, 1.0
    %v1466 = vmul.f32 %v1258, %v1458
    %v1467 = vmul.f32 %v1259, %v1459
    %v1468 = vmul.f32 %v1260, %v1460
    %v1469 = vmul.f32 %v1261, %v1461
    %v1470 = vmul.f32 %v1262, %v1462
    %v1471 = vmul.f32 %v1263, %v1463
    %v1472 = vmul.f32 %v1264, %v1464
    %v1473 = vmul.f32 %v1265, %v1465
    %v1474 = vld [vmem:[%s1] sm:$0xff]
    %v1475 = vld [vmem:[%s1 + $0x8] sm:$0xff]
    %v1476 = vld [vmem:[%s1 + $0x10] sm:$0xff]
    %v1477 = vld [vmem:[%s1 + $0x18] sm:$0xff]
    %v1478 = vld [vmem:[%s1 + $0x20] sm:$0xff]
    %v1479 = vld [vmem:[%s1 + $0x28] sm:$0xff]
    %v1480 = vld [vmem:[%s1 + $0x30] sm:$0xff]
    %v1481 = vld [vmem:[%s1 + $0x38] sm:$0xff]
    %1483 = vset.pattern.permute.xlu0 0
    %1484 = vperm.xlu0 %1483, %v1474
    %v1485 = vpop.permute.xlu0 %1484
    %1488 = vset.pattern.permute.xlu0 0
    %1489 = vperm.xlu0 %1488, %v1475
    %v1490 = vpop.permute.xlu0 %1489
    %1493 = vset.pattern.permute.xlu0 0
    %1494 = vperm.xlu0 %1493, %v1476
    %v1495 = vpop.permute.xlu0 %1494
    %1498 = vset.pattern.permute.xlu0 0
    %1499 = vperm.xlu0 %1498, %v1477
    %v1500 = vpop.permute.xlu0 %1499
    %1503 = vset.pattern.permute.xlu0 0
    %1504 = vperm.xlu0 %1503, %v1478
    %v1505 = vpop.permute.xlu0 %1504
    %1508 = vset.pattern.permute.xlu0 0
    %1509 = vperm.xlu0 %1508, %v1479
    %v1510 = vpop.permute.xlu0 %1509
    %1513 = vset.pattern.permute.xlu0 0
    %1514 = vperm.xlu0 %1513, %v1480
    %v1515 = vpop.permute.xlu0 %1514
    %1518 = vset.pattern.permute.xlu0 0
    %1519 = vperm.xlu0 %1518, %v1481
    %v1520 = vpop.permute.xlu0 %1519
    %v1522 = vmul.f32 %v1466, %v1485
    %v1523 = vmul.f32 %v1467, %v1490
    %v1524 = vmul.f32 %v1468, %v1495
    %v1525 = vmul.f32 %v1469, %v1500
    %v1526 = vmul.f32 %v1470, %v1505
    %v1527 = vmul.f32 %v1471, %v1510
    %v1528 = vmul.f32 %v1472, %v1515
    %v1529 = vmul.f32 %v1473, %v1520
    %v1530 = vrot.slane %v1522, 4
    %v1531 = vadd.f32 %v1522, %v1530
    %v1532 = vrot.slane %v1531, 2
    %v1533 = vadd.f32 %v1531, %v1532
    %v1534 = vrot.slane %v1533, 1
    %v1535 = vadd.f32 %v1533, %v1534
    %v1536 = vrot.slane %v1523, 4
    %v1537 = vadd.f32 %v1523, %v1536
    %v1538 = vrot.slane %v1537, 2
    %v1539 = vadd.f32 %v1537, %v1538
    %v1540 = vrot.slane %v1539, 1
    %v1541 = vadd.f32 %v1539, %v1540
    %v1542 = vrot.slane %v1524, 4
    %v1543 = vadd.f32 %v1524, %v1542
    %v1544 = vrot.slane %v1543, 2
    %v1545 = vadd.f32 %v1543, %v1544
    %v1546 = vrot.slane %v1545, 1
    %v1547 = vadd.f32 %v1545, %v1546
    %v1548 = vrot.slane %v1525, 4
    %v1549 = vadd.f32 %v1525, %v1548
    %v1550 = vrot.slane %v1549, 2
    %v1551 = vadd.f32 %v1549, %v1550
    %v1552 = vrot.slane %v1551, 1
    %v1553 = vadd.f32 %v1551, %v1552
    %v1554 = vrot.slane %v1526, 4
    %v1555 = vadd.f32 %v1526, %v1554
    %v1556 = vrot.slane %v1555, 2
    %v1557 = vadd.f32 %v1555, %v1556
    %v1558 = vrot.slane %v1557, 1
    %v1559 = vadd.f32 %v1557, %v1558
    %v1560 = vrot.slane %v1527, 4
    %v1561 = vadd.f32 %v1527, %v1560
    %v1562 = vrot.slane %v1561, 2
    %v1563 = vadd.f32 %v1561, %v1562
    %v1564 = vrot.slane %v1563, 1
    %v1565 = vadd.f32 %v1563, %v1564
    %v1566 = vrot.slane %v1528, 4
    %v1567 = vadd.f32 %v1528, %v1566
    %v1568 = vrot.slane %v1567, 2
    %v1569 = vadd.f32 %v1567, %v1568
    %v1570 = vrot.slane %v1569, 1
    %v1571 = vadd.f32 %v1569, %v1570
    %v1572 = vrot.slane %v1529, 4
    %v1573 = vadd.f32 %v1529, %v1572
    %v1574 = vrot.slane %v1573, 2
    %v1575 = vadd.f32 %v1573, %v1574
    %v1576 = vrot.slane %v1575, 1
    %v1577 = vadd.f32 %v1575, %v1576
    %vm1578 = vcmask 7168
    %v1579 = vsel %vm1578, %v1474, 0.0
    %v1580 = vrot.slane %v1579, 4
    %v1581 = vadd.f32 %v1579, %v1580
    %v1582 = vrot.slane %v1581, 2
    %v1583 = vadd.f32 %v1581, %v1582
    %v1584 = vrot.slane %v1583, 1
    %v1585 = vadd.f32 %v1583, %v1584
    %v1586 = vsel %vm1578, %v1475, 0.0
    %v1587 = vrot.slane %v1586, 4
    %v1588 = vadd.f32 %v1586, %v1587
    %v1589 = vrot.slane %v1588, 2
    %v1590 = vadd.f32 %v1588, %v1589
    %v1591 = vrot.slane %v1590, 1
    %v1592 = vadd.f32 %v1590, %v1591
    %v1593 = vsel %vm1578, %v1476, 0.0
    %v1594 = vrot.slane %v1593, 4
    %v1595 = vadd.f32 %v1593, %v1594
    %v1596 = vrot.slane %v1595, 2
    %v1597 = vadd.f32 %v1595, %v1596
    %v1598 = vrot.slane %v1597, 1
    %v1599 = vadd.f32 %v1597, %v1598
    %v1600 = vsel %vm1578, %v1477, 0.0
    %v1601 = vrot.slane %v1600, 4
    %v1602 = vadd.f32 %v1600, %v1601
    %v1603 = vrot.slane %v1602, 2
    %v1604 = vadd.f32 %v1602, %v1603
    %v1605 = vrot.slane %v1604, 1
    %v1606 = vadd.f32 %v1604, %v1605
    %v1607 = vsel %vm1578, %v1478, 0.0
    %v1608 = vrot.slane %v1607, 4
    %v1609 = vadd.f32 %v1607, %v1608
    %v1610 = vrot.slane %v1609, 2
    %v1611 = vadd.f32 %v1609, %v1610
    %v1612 = vrot.slane %v1611, 1
    %v1613 = vadd.f32 %v1611, %v1612
    %v1614 = vsel %vm1578, %v1479, 0.0
    %v1615 = vrot.slane %v1614, 4
    %v1616 = vadd.f32 %v1614, %v1615
    %v1617 = vrot.slane %v1616, 2
    %v1618 = vadd.f32 %v1616, %v1617
    %v1619 = vrot.slane %v1618, 1
    %v1620 = vadd.f32 %v1618, %v1619
    %v1621 = vsel %vm1578, %v1480, 0.0
    %v1622 = vrot.slane %v1621, 4
    %v1623 = vadd.f32 %v1621, %v1622
    %v1624 = vrot.slane %v1623, 2
    %v1625 = vadd.f32 %v1623, %v1624
    %v1626 = vrot.slane %v1625, 1
    %v1627 = vadd.f32 %v1625, %v1626
    %v1628 = vsel %vm1578, %v1481, 0.0
    %v1629 = vrot.slane %v1628, 4
    %v1630 = vadd.f32 %v1628, %v1629
    %v1631 = vrot.slane %v1630, 2
    %v1632 = vadd.f32 %v1630, %v1631
    %v1633 = vrot.slane %v1632, 1
    %v1634 = vadd.f32 %v1632, %v1633
    %v1635 = vmax.f32 %v1585, 1.0
    %v1636 = vmax.f32 %v1592, 1.0
    %v1637 = vmax.f32 %v1599, 1.0
    %v1638 = vmax.f32 %v1606, 1.0
    %v1639 = vmax.f32 %v1613, 1.0
    %v1640 = vmax.f32 %v1620, 1.0
    %v1641 = vmax.f32 %v1627, 1.0
    %v1642 = vmax.f32 %v1634, 1.0
    %1644 = vset.pattern.permute.xlu0 0
    %1645 = vperm.xlu0 %1644, %v1635
    %v1646 = vpop.permute.xlu0 %1645
    %1649 = vset.pattern.permute.xlu0 0
    %1650 = vperm.xlu0 %1649, %v1636
    %v1651 = vpop.permute.xlu0 %1650
    %1654 = vset.pattern.permute.xlu0 0
    %1655 = vperm.xlu0 %1654, %v1637
    %v1656 = vpop.permute.xlu0 %1655
    %1659 = vset.pattern.permute.xlu0 0
    %1660 = vperm.xlu0 %1659, %v1638
    %v1661 = vpop.permute.xlu0 %1660
    %1664 = vset.pattern.permute.xlu0 0
    %1665 = vperm.xlu0 %1664, %v1639
    %v1666 = vpop.permute.xlu0 %1665
    %1669 = vset.pattern.permute.xlu0 0
    %1670 = vperm.xlu0 %1669, %v1640
    %v1671 = vpop.permute.xlu0 %1670
    %1674 = vset.pattern.permute.xlu0 0
    %1675 = vperm.xlu0 %1674, %v1641
    %v1676 = vpop.permute.xlu0 %1675
    %1679 = vset.pattern.permute.xlu0 0
    %1680 = vperm.xlu0 %1679, %v1642
    %v1681 = vpop.permute.xlu0 %1680
    %v1683 = vrcp.pop %v1646
    %v1684 = vmul.f32 %v1535, %v1683
    %v1685 = vrcp.pop %v1651
    %v1686 = vmul.f32 %v1541, %v1685
    %v1687 = vrcp.pop %v1656
    %v1688 = vmul.f32 %v1547, %v1687
    %v1689 = vrcp.pop %v1661
    %v1690 = vmul.f32 %v1553, %v1689
    %v1691 = vrcp.pop %v1666
    %v1692 = vmul.f32 %v1559, %v1691
    %v1693 = vrcp.pop %v1671
    %v1694 = vmul.f32 %v1565, %v1693
    %v1695 = vrcp.pop %v1676
    %v1696 = vmul.f32 %v1571, %v1695
    %v1697 = vrcp.pop %v1681
    %v1698 = vmul.f32 %v1577, %v1697
    %v1699 = vmul.f32 %v1684, 0.5
    %v1700 = vmul.f32 %v1686, 0.5
    %v1701 = vmul.f32 %v1688, 0.5
    %v1702 = vmul.f32 %v1690, 0.5
    %v1703 = vmul.f32 %v1692, 0.5
    %v1704 = vmul.f32 %v1694, 0.5
    %v1705 = vmul.f32 %v1696, 0.5
    %v1706 = vmul.f32 %v1698, 0.5
    %v1707 = vmul.f32 %v1684, 0.70710677
    %v1708 = vmul.f32 %v1686, 0.70710677
    %v1709 = vmul.f32 %v1688, 0.70710677
    %v1710 = vmul.f32 %v1690, 0.70710677
    %v1711 = vmul.f32 %v1692, 0.70710677
    %v1712 = vmul.f32 %v1694, 0.70710677
    %v1713 = vmul.f32 %v1696, 0.70710677
    %v1714 = vmul.f32 %v1698, 0.70710677
    %v1715 = vand.u32 2147483647, %v1707
    %v1716 = vand.u32 2147483647, %v1708
    %v1717 = vand.u32 2147483647, %v1709
    %v1718 = vand.u32 2147483647, %v1710
    %v1719 = vand.u32 2147483647, %v1711
    %v1720 = vand.u32 2147483647, %v1712
    %v1721 = vand.u32 2147483647, %v1713
    %v1722 = vand.u32 2147483647, %v1714
    %v1723 = vmul.f32 %v1715, 0.3275911
    %v1724 = vmul.f32 %v1716, 0.3275911
    %v1725 = vmul.f32 %v1717, 0.3275911
    %v1726 = vmul.f32 %v1718, 0.3275911
    %v1727 = vmul.f32 %v1719, 0.3275911
    %v1728 = vmul.f32 %v1720, 0.3275911
    %v1729 = vmul.f32 %v1721, 0.3275911
    %v1730 = vmul.f32 %v1722, 0.3275911
    %v1731 = vadd.f32 %v1723, 1.0
    %v1732 = vadd.f32 %v1724, 1.0
    %v1733 = vadd.f32 %v1725, 1.0
    %v1734 = vadd.f32 %v1726, 1.0
    %v1735 = vadd.f32 %v1727, 1.0
    %v1736 = vadd.f32 %v1728, 1.0
    %v1737 = vadd.f32 %v1729, 1.0
    %v1738 = vadd.f32 %v1730, 1.0
    %v1739 = vrcp.pop %v1731
    %v1740 = vmul.f32 1.0, %v1739
    %v1741 = vrcp.pop %v1732
    %v1742 = vmul.f32 1.0, %v1741
    %v1743 = vrcp.pop %v1733
    %v1744 = vmul.f32 1.0, %v1743
    %v1745 = vrcp.pop %v1734
    %v1746 = vmul.f32 1.0, %v1745
    %v1747 = vrcp.pop %v1735
    %v1748 = vmul.f32 1.0, %v1747
    %v1749 = vrcp.pop %v1736
    %v1750 = vmul.f32 1.0, %v1749
    %v1751 = vrcp.pop %v1737
    %v1752 = vmul.f32 1.0, %v1751
    %v1753 = vrcp.pop %v1738
    %v1754 = vmul.f32 1.0, %v1753
    %v1755 = vmul.f32 %v1740, 1.0614054
    %v1756 = vmul.f32 %v1742, 1.0614054
    %v1757 = vmul.f32 %v1744, 1.0614054
    %v1758 = vmul.f32 %v1746, 1.0614054
    %v1759 = vmul.f32 %v1748, 1.0614054
    %v1760 = vmul.f32 %v1750, 1.0614054
    %v1761 = vmul.f32 %v1752, 1.0614054
    %v1762 = vmul.f32 %v1754, 1.0614054
    %v1763 = vadd.f32 %v1755, -1.4531521
    %v1764 = vadd.f32 %v1756, -1.4531521
    %v1765 = vadd.f32 %v1757, -1.4531521
    %v1766 = vadd.f32 %v1758, -1.4531521
    %v1767 = vadd.f32 %v1759, -1.4531521
    %v1768 = vadd.f32 %v1760, -1.4531521
    %v1769 = vadd.f32 %v1761, -1.4531521
    %v1770 = vadd.f32 %v1762, -1.4531521
    %v1771 = vmul.f32 %v1763, %v1740
    %v1772 = vmul.f32 %v1764, %v1742
    %v1773 = vmul.f32 %v1765, %v1744
    %v1774 = vmul.f32 %v1766, %v1746
    %v1775 = vmul.f32 %v1767, %v1748
    %v1776 = vmul.f32 %v1768, %v1750
    %v1777 = vmul.f32 %v1769, %v1752
    %v1778 = vmul.f32 %v1770, %v1754
    %v1779 = vadd.f32 %v1771, 1.4214138
    %v1780 = vadd.f32 %v1772, 1.4214138
    %v1781 = vadd.f32 %v1773, 1.4214138
    %v1782 = vadd.f32 %v1774, 1.4214138
    %v1783 = vadd.f32 %v1775, 1.4214138
    %v1784 = vadd.f32 %v1776, 1.4214138
    %v1785 = vadd.f32 %v1777, 1.4214138
    %v1786 = vadd.f32 %v1778, 1.4214138
    %v1787 = vmul.f32 %v1779, %v1740
    %v1788 = vmul.f32 %v1780, %v1742
    %v1789 = vmul.f32 %v1781, %v1744
    %v1790 = vmul.f32 %v1782, %v1746
    %v1791 = vmul.f32 %v1783, %v1748
    %v1792 = vmul.f32 %v1784, %v1750
    %v1793 = vmul.f32 %v1785, %v1752
    %v1794 = vmul.f32 %v1786, %v1754
    %v1795 = vadd.f32 %v1787, -0.28449672
    %v1796 = vadd.f32 %v1788, -0.28449672
    %v1797 = vadd.f32 %v1789, -0.28449672
    %v1798 = vadd.f32 %v1790, -0.28449672
    %v1799 = vadd.f32 %v1791, -0.28449672
    %v1800 = vadd.f32 %v1792, -0.28449672
    %v1801 = vadd.f32 %v1793, -0.28449672
    %v1802 = vadd.f32 %v1794, -0.28449672
    %v1803 = vmul.f32 %v1795, %v1740
    %v1804 = vmul.f32 %v1796, %v1742
    %v1805 = vmul.f32 %v1797, %v1744
    %v1806 = vmul.f32 %v1798, %v1746
    %v1807 = vmul.f32 %v1799, %v1748
    %v1808 = vmul.f32 %v1800, %v1750
    %v1809 = vmul.f32 %v1801, %v1752
    %v1810 = vmul.f32 %v1802, %v1754
    %v1811 = vadd.f32 %v1803, 0.2548296
    %v1812 = vadd.f32 %v1804, 0.2548296
    %v1813 = vadd.f32 %v1805, 0.2548296
    %v1814 = vadd.f32 %v1806, 0.2548296
    %v1815 = vadd.f32 %v1807, 0.2548296
    %v1816 = vadd.f32 %v1808, 0.2548296
    %v1817 = vadd.f32 %v1809, 0.2548296
    %v1818 = vadd.f32 %v1810, 0.2548296
    %v1819 = vmul.f32 %v1811, %v1740
    %v1820 = vmul.f32 %v1812, %v1742
    %v1821 = vmul.f32 %v1813, %v1744
    %v1822 = vmul.f32 %v1814, %v1746
    %v1823 = vmul.f32 %v1815, %v1748
    %v1824 = vmul.f32 %v1816, %v1750
    %v1825 = vmul.f32 %v1817, %v1752
    %v1826 = vmul.f32 %v1818, %v1754
    %v1827 = vsub.f32 0.0, %v1715
    %v1828 = vsub.f32 0.0, %v1716
    %v1829 = vsub.f32 0.0, %v1717
    %v1830 = vsub.f32 0.0, %v1718
    %v1831 = vsub.f32 0.0, %v1719
    %v1832 = vsub.f32 0.0, %v1720
    %v1833 = vsub.f32 0.0, %v1721
    %v1834 = vsub.f32 0.0, %v1722
    %v1835 = vmul.f32 %v1827, %v1715
    %v1836 = vmul.f32 %v1828, %v1716
    %v1837 = vmul.f32 %v1829, %v1717
    %v1838 = vmul.f32 %v1830, %v1718
    %v1839 = vmul.f32 %v1831, %v1719
    %v1840 = vmul.f32 %v1832, %v1720
    %v1841 = vmul.f32 %v1833, %v1721
    %v1842 = vmul.f32 %v1834, %v1722
    %v1843 = vmul.f32 %v1835, 1.442695
    %v1844 = vpow.pop %v1843
    %v1845 = vmul.f32 %v1836, 1.442695
    %v1846 = vpow.pop %v1845
    %v1847 = vmul.f32 %v1837, 1.442695
    %v1848 = vpow.pop %v1847
    %v1849 = vmul.f32 %v1838, 1.442695
    %v1850 = vpow.pop %v1849
    %v1851 = vmul.f32 %v1839, 1.442695
    %v1852 = vpow.pop %v1851
    %v1853 = vmul.f32 %v1840, 1.442695
    %v1854 = vpow.pop %v1853
    %v1855 = vmul.f32 %v1841, 1.442695
    %v1856 = vpow.pop %v1855
    %v1857 = vmul.f32 %v1842, 1.442695
    %v1858 = vpow.pop %v1857
    %v1859 = vmul.f32 %v1819, %v1844
    %v1860 = vmul.f32 %v1820, %v1846
    %v1861 = vmul.f32 %v1821, %v1848
    %v1862 = vmul.f32 %v1822, %v1850
    %v1863 = vmul.f32 %v1823, %v1852
    %v1864 = vmul.f32 %v1824, %v1854
    %v1865 = vmul.f32 %v1825, %v1856
    %v1866 = vmul.f32 %v1826, %v1858
    %v1867 = vsub.f32 1.0, %v1859
    %v1868 = vsub.f32 1.0, %v1860
    %v1869 = vsub.f32 1.0, %v1861
    %v1870 = vsub.f32 1.0, %v1862
    %v1871 = vsub.f32 1.0, %v1863
    %v1872 = vsub.f32 1.0, %v1864
    %v1873 = vsub.f32 1.0, %v1865
    %v1874 = vsub.f32 1.0, %v1866
    %vm1875 = vcmp.ge.f32.partialorder %v1707, 0.0
    %vm1876 = vcmp.ge.f32.partialorder %v1708, 0.0
    %vm1877 = vcmp.ge.f32.partialorder %v1709, 0.0
    %vm1878 = vcmp.ge.f32.partialorder %v1710, 0.0
    %vm1879 = vcmp.ge.f32.partialorder %v1711, 0.0
    %vm1880 = vcmp.ge.f32.partialorder %v1712, 0.0
    %vm1881 = vcmp.ge.f32.partialorder %v1713, 0.0
    %vm1882 = vcmp.ge.f32.partialorder %v1714, 0.0
    %v1883 = vsub.f32 0.0, %v1867
    %v1884 = vsub.f32 0.0, %v1868
    %v1885 = vsub.f32 0.0, %v1869
    %v1886 = vsub.f32 0.0, %v1870
    %v1887 = vsub.f32 0.0, %v1871
    %v1888 = vsub.f32 0.0, %v1872
    %v1889 = vsub.f32 0.0, %v1873
    %v1890 = vsub.f32 0.0, %v1874
    %v1891 = vsel %vm1875, %v1867, %v1883
    %v1892 = vsel %vm1876, %v1868, %v1884
    %v1893 = vsel %vm1877, %v1869, %v1885
    %v1894 = vsel %vm1878, %v1870, %v1886
    %v1895 = vsel %vm1879, %v1871, %v1887
    %v1896 = vsel %vm1880, %v1872, %v1888
    %v1897 = vsel %vm1881, %v1873, %v1889
    %v1898 = vsel %vm1882, %v1874, %v1890
    %v1899 = vadd.f32 %v1891, 1.0
    %v1900 = vadd.f32 %v1892, 1.0
    %v1901 = vadd.f32 %v1893, 1.0
    %v1902 = vadd.f32 %v1894, 1.0
    %v1903 = vadd.f32 %v1895, 1.0
    %v1904 = vadd.f32 %v1896, 1.0
    %v1905 = vadd.f32 %v1897, 1.0
    %v1906 = vadd.f32 %v1898, 1.0
    %v1907 = vmul.f32 %v1699, %v1899
    %v1908 = vmul.f32 %v1700, %v1900
    %v1909 = vmul.f32 %v1701, %v1901
    %v1910 = vmul.f32 %v1702, %v1902
    %v1911 = vmul.f32 %v1703, %v1903
    %v1912 = vmul.f32 %v1704, %v1904
    %v1913 = vmul.f32 %v1705, %v1905
    %v1914 = vmul.f32 %v1706, %v1906
    %v1915 = vpack.c.bf16 %v1907, %v1907
    %v1916 = vpack.c.bf16 %v1908, %v1908
    %v1917 = vpack.c.bf16 %v1909, %v1909
    %v1918 = vpack.c.bf16 %v1910, %v1910
    %v1919 = vpack.c.bf16 %v1911, %v1911
    %v1920 = vpack.c.bf16 %v1912, %v1912
    %v1921 = vpack.c.bf16 %v1913, %v1913
    %v1922 = vpack.c.bf16 %v1914, %v1914
    %v1923 = vld [vmem:[#allocation5] sm:$0xf]
    %v1924 = vld [vmem:[#allocation5 + $0x4] sm:$0xf]
    %v1925 = vld [vmem:[#allocation5 + $0x8] sm:$0xf]
    %v1926 = vld [vmem:[#allocation5 + $0xc] sm:$0xf]
    %v1927 = vld [vmem:[#allocation5 + $0x10] sm:$0xf]
    %v1928 = vld [vmem:[#allocation5 + $0x14] sm:$0xf]
    %v1929 = vld [vmem:[#allocation5 + $0x18] sm:$0xf]
    %v1930 = vld [vmem:[#allocation5 + $0x1c] sm:$0xf]
    %v1931 = vld [vmem:[#allocation5 + $0x20] sm:$0xf]
    %v1932 = vld [vmem:[#allocation5 + $0x24] sm:$0xf]
    %v1933 = vld [vmem:[#allocation5 + $0x28] sm:$0xf]
    %v1934 = vld [vmem:[#allocation5 + $0x2c] sm:$0xf]
    %v1935 = vld [vmem:[#allocation5 + $0x30] sm:$0xf]
    %v1936 = vld [vmem:[#allocation5 + $0x34] sm:$0xf]
    %v1937 = vld [vmem:[#allocation5 + $0x38] sm:$0xf]
    %v1938 = vld [vmem:[#allocation5 + $0x3c] sm:$0xf]
    %v1939 = vld [vmem:[%s7] sm:$0x1]
    %v1941 = vlaneseq
    %v1942 = vshrl.u32 %v1941, 7
    %v1943 = vsub.s32 0, %v1942
    %v1944 = vrot.slane %v1939, %v1943
    %v1954 = vunpack.c.l.b16 %v1915
    %v1955 = vunpack.c.l.b16 %v1916
    %v1956 = vunpack.c.l.b16 %v1917
    %v1957 = vunpack.c.l.b16 %v1918
    %v1958 = vunpack.c.l.b16 %v1919
    %v1959 = vunpack.c.l.b16 %v1920
    %v1960 = vunpack.c.l.b16 %v1921
    %v1961 = vunpack.c.l.b16 %v1922
    %vm1962 = vcmask 1041409
    %v1963 = vsel %vm1962, %v1955, %v1954
    %vm1964 = vcmask 1042434
    %v1965 = vsel %vm1964, %v1956, %v1963
    %vm1966 = vcmask 1043459
    %v1967 = vsel %vm1966, %v1957, %v1965
    %vm1968 = vcmask 1044484
    %v1969 = vsel %vm1968, %v1958, %v1967
    %vm1970 = vcmask 1045509
    %v1971 = vsel %vm1970, %v1959, %v1969
    %vm1972 = vcmask 1046534
    %v1973 = vsel %vm1972, %v1960, %v1971
    %vm1974 = vcmask 1047559
    %v1975 = vsel %vm1974, %v1961, %v1973
    %v1976 = vpack.c.b16 %v1975, %v1975
    %v1994 = vunpack.c.l.b16 %v1923
    %v1995 = vunpack.c.l.b16 %v1924
    %v1996 = vunpack.c.l.b16 %v1925
    %v1997 = vunpack.c.l.b16 %v1926
    %v1998 = vunpack.c.l.b16 %v1927
    %v1999 = vunpack.c.l.b16 %v1928
    %v2000 = vunpack.c.l.b16 %v1929
    %v2001 = vunpack.c.l.b16 %v1930
    %v2002 = vunpack.c.l.b16 %v1931
    %v2003 = vunpack.c.l.b16 %v1932
    %v2004 = vunpack.c.l.b16 %v1933
    %v2005 = vunpack.c.l.b16 %v1934
    %v2006 = vunpack.c.l.b16 %v1935
    %v2007 = vunpack.c.l.b16 %v1936
    %v2008 = vunpack.c.l.b16 %v1937
    %v2009 = vunpack.c.l.b16 %v1938
    %v2010 = vpack.c.b16 %v1995, %v1994
    %v2011 = vpack.c.b16 %v1997, %v1996
    %v2012 = vpack.c.b16 %v1999, %v1998
    %v2013 = vpack.c.b16 %v2001, %v2000
    %v2014 = vpack.c.b16 %v2003, %v2002
    %v2015 = vpack.c.b16 %v2005, %v2004
    %v2016 = vpack.c.b16 %v2007, %v2006
    %v2017 = vpack.c.b16 %v2009, %v2008
    %2026 = vmatprep.subr.bf16.mxu0 0
    %2027 = vmatpush1.bf16.msra.mxu0 %v2010
    %2028 = vmatprep.subr.bf16.mxu0 0
    %2029 = vmatpush1.bf16.msra.mxu0 %v2011
    %2030 = vmatprep.subr.bf16.mxu0 0
    %2031 = vmatpush1.bf16.msra.mxu0 %v2012
    %2032 = vmatprep.subr.bf16.mxu0 0
    %2033 = vmatpush1.bf16.msra.mxu0 %v2013
    %2034 = vmatprep.subr.bf16.mxu0 0
    %2035 = vmatpush1.bf16.msra.mxu0 %v2014
    %2036 = vmatprep.subr.bf16.mxu0 0
    %2037 = vmatpush1.bf16.msra.mxu0 %v2015
    %2038 = vmatprep.subr.bf16.mxu0 0
    %2039 = vmatpush1.bf16.msra.mxu0 %v2016
    %2040 = vmatprep.subr.bf16.mxu0 0
    %2041 = vmatpush1.bf16.msra.mxu0 %v2017
    %2042 = vmatprep.subr.bf16.mxu0 0
    %2043 = vmatpush1.bf16.msra.mxu0 0
    %2044 = vmatprep.subr.bf16.mxu0 0
    %2045 = vmatpush1.bf16.msra.mxu0 0
    %2046 = vmatprep.subr.bf16.mxu0 0
    %2047 = vmatpush1.bf16.msra.mxu0 0
    %2048 = vmatprep.subr.bf16.mxu0 0
    %2049 = vmatpush1.bf16.msra.mxu0 0
    %2050 = vmatprep.subr.bf16.mxu0 0
    %2051 = vmatpush1.bf16.msra.mxu0 0
    %2052 = vmatprep.subr.bf16.mxu0 0
    %2053 = vmatpush1.bf16.msra.mxu0 0
    %2054 = vmatprep.subr.bf16.mxu0 0
    %2055 = vmatpush1.bf16.msra.mxu0 0
    %2056 = vmatprep.subr.bf16.mxu0 0
    %2057 = vmatpush1.bf16.msra.mxu0 0
    %2058 = vmatprep.mubr.bf16.mxu0 0
    %2059 = vmatmul.mubr.bf16.gmra.mrb[0].mxu0 %v1976
    %v2060 = vpop.f32.mrb[0].mxu0
    %v2061 = vadd.f32 %v1944, %v2060
    %v2062 = vpop.f32.mrb[0].mxu0
    %v2063 = vpop.f32.mrb[0].mxu0
    %v2064 = vpop.f32.mrb[0].mxu0
    %2065 = vdwg.mxu0
    %v2066 = vmul.f32 %v2061, 0.5
    %v2067 = vmul.f32 %v2061, 0.70710677
    %v2068 = vand.u32 2147483647, %v2067
    %v2069 = vmul.f32 %v2068, 0.3275911
    %v2070 = vadd.f32 %v2069, 1.0
    %v2071 = vrcp.pop %v2070
    %v2072 = vmul.f32 1.0, %v2071
    %v2073 = vmul.f32 %v2072, 1.0614054
    %v2074 = vadd.f32 %v2073, -1.4531521
    %v2075 = vmul.f32 %v2074, %v2072
    %v2076 = vadd.f32 %v2075, 1.4214138
    %v2077 = vmul.f32 %v2076, %v2072
    %v2078 = vadd.f32 %v2077, -0.28449672
    %v2079 = vmul.f32 %v2078, %v2072
    %v2080 = vadd.f32 %v2079, 0.2548296
    %v2081 = vmul.f32 %v2080, %v2072
    %v2082 = vsub.f32 0.0, %v2068
    %v2083 = vmul.f32 %v2082, %v2068
    %v2084 = vmul.f32 %v2083, 1.442695
    %v2085 = vpow.pop %v2084
    %v2086 = vmul.f32 %v2081, %v2085
    %v2087 = vsub.f32 1.0, %v2086
    %vm2088 = vcmp.ge.f32.partialorder %v2067, 0.0
    %v2089 = vsub.f32 0.0, %v2087
    %v2090 = vsel %vm2088, %v2087, %v2089
    %v2091 = vadd.f32 %v2090, 1.0
    %v2092 = vmul.f32 %v2066, %v2091
    %v2093 = vpack.c.bf16 %v2092, %v2092
    %s2094 = scalar_lea.vmem [#allocation5], 64
    %v2095 = vld [vmem:[%s2094] sm:$0xf]
    %v2096 = vld [vmem:[%s2094 + $0x4] sm:$0xf]
    %v2097 = vld [vmem:[%s2094 + $0x8] sm:$0xf]
    %v2098 = vld [vmem:[%s2094 + $0xc] sm:$0xf]
    %v2099 = vld [vmem:[%s2094 + $0x10] sm:$0xf]
    %v2100 = vld [vmem:[%s2094 + $0x14] sm:$0xf]
    %v2101 = vld [vmem:[%s2094 + $0x18] sm:$0xf]
    %v2102 = vld [vmem:[%s2094 + $0x1c] sm:$0xf]
    %v2103 = vld [vmem:[%s2094 + $0x20] sm:$0xf]
    %v2104 = vld [vmem:[%s2094 + $0x24] sm:$0xf]
    %v2105 = vld [vmem:[%s2094 + $0x28] sm:$0xf]
    %v2106 = vld [vmem:[%s2094 + $0x2c] sm:$0xf]
    %v2107 = vld [vmem:[%s2094 + $0x30] sm:$0xf]
    %v2108 = vld [vmem:[%s2094 + $0x34] sm:$0xf]
    %v2109 = vld [vmem:[%s2094 + $0x38] sm:$0xf]
    %v2110 = vld [vmem:[%s2094 + $0x3c] sm:$0xf]
    %s2111 = scalar_lea.vmem %s7, 1
    %v2112 = vld [vmem:[%s2111] sm:$0x1]
    %v2114 = vlaneseq
    %v2115 = vshrl.u32 %v2114, 7
    %v2116 = vsub.s32 0, %v2115
    %v2117 = vrot.slane %v2112, %v2116
    %v2135 = vunpack.c.l.b16 %v2095
    %v2136 = vunpack.c.l.b16 %v2096
    %v2137 = vunpack.c.l.b16 %v2097
    %v2138 = vunpack.c.l.b16 %v2098
    %v2139 = vunpack.c.l.b16 %v2099
    %v2140 = vunpack.c.l.b16 %v2100
    %v2141 = vunpack.c.l.b16 %v2101
    %v2142 = vunpack.c.l.b16 %v2102
    %v2143 = vunpack.c.l.b16 %v2103
    %v2144 = vunpack.c.l.b16 %v2104
    %v2145 = vunpack.c.l.b16 %v2105
    %v2146 = vunpack.c.l.b16 %v2106
    %v2147 = vunpack.c.l.b16 %v2107
    %v2148 = vunpack.c.l.b16 %v2108
    %v2149 = vunpack.c.l.b16 %v2109
    %v2150 = vunpack.c.l.b16 %v2110
    %v2151 = vpack.c.b16 %v2136, %v2135
    %v2152 = vpack.c.b16 %v2138, %v2137
    %v2153 = vpack.c.b16 %v2140, %v2139
    %v2154 = vpack.c.b16 %v2142, %v2141
    %v2155 = vpack.c.b16 %v2144, %v2143
    %v2156 = vpack.c.b16 %v2146, %v2145
    %v2157 = vpack.c.b16 %v2148, %v2147
    %v2158 = vpack.c.b16 %v2150, %v2149
    %2167 = vmatprep.subr.bf16.mxu0 0
    %2168 = vmatpush1.bf16.msra.mxu0 %v2151
    %2169 = vmatprep.subr.bf16.mxu0 0
    %2170 = vmatpush1.bf16.msra.mxu0 %v2152
    %2171 = vmatprep.subr.bf16.mxu0 0
    %2172 = vmatpush1.bf16.msra.mxu0 %v2153
    %2173 = vmatprep.subr.bf16.mxu0 0
    %2174 = vmatpush1.bf16.msra.mxu0 %v2154
    %2175 = vmatprep.subr.bf16.mxu0 0
    %2176 = vmatpush1.bf16.msra.mxu0 %v2155
    %2177 = vmatprep.subr.bf16.mxu0 0
    %2178 = vmatpush1.bf16.msra.mxu0 %v2156
    %2179 = vmatprep.subr.bf16.mxu0 0
    %2180 = vmatpush1.bf16.msra.mxu0 %v2157
    %2181 = vmatprep.subr.bf16.mxu0 0
    %2182 = vmatpush1.bf16.msra.mxu0 %v2158
    %2183 = vmatprep.subr.bf16.mxu0 0
    %2184 = vmatpush1.bf16.msra.mxu0 0
    %2185 = vmatprep.subr.bf16.mxu0 0
    %2186 = vmatpush1.bf16.msra.mxu0 0
    %2187 = vmatprep.subr.bf16.mxu0 0
    %2188 = vmatpush1.bf16.msra.mxu0 0
    %2189 = vmatprep.subr.bf16.mxu0 0
    %2190 = vmatpush1.bf16.msra.mxu0 0
    %2191 = vmatprep.subr.bf16.mxu0 0
    %2192 = vmatpush1.bf16.msra.mxu0 0
    %2193 = vmatprep.subr.bf16.mxu0 0
    %2194 = vmatpush1.bf16.msra.mxu0 0
    %2195 = vmatprep.subr.bf16.mxu0 0
    %2196 = vmatpush1.bf16.msra.mxu0 0
    %2197 = vmatprep.subr.bf16.mxu0 0
    %2198 = vmatpush1.bf16.msra.mxu0 0
    %2199 = vmatprep.mubr.bf16.mxu0 0
    %2200 = vmatmul.mubr.bf16.gmra.mrb[0].mxu0 %v2093
    %v2201 = vpop.f32.mrb[0].mxu0
    %v2202 = vadd.f32 %v2117, %v2201
    %v2203 = vpop.f32.mrb[0].mxu0
    %v2204 = vpop.f32.mrb[0].mxu0
    %v2205 = vpop.f32.mrb[0].mxu0
    %2206 = vdwg.mxu0
    %v2207 = vmul.f32 %v2202, 0.5
    %v2208 = vmul.f32 %v2202, 0.70710677
    %v2209 = vand.u32 2147483647, %v2208
    %v2210 = vmul.f32 %v2209, 0.3275911
    %v2211 = vadd.f32 %v2210, 1.0
    %v2212 = vrcp.pop %v2211
    %v2213 = vmul.f32 1.0, %v2212
    %v2214 = vmul.f32 %v2213, 1.0614054
    %v2215 = vadd.f32 %v2214, -1.4531521
    %v2216 = vmul.f32 %v2215, %v2213
    %v2217 = vadd.f32 %v2216, 1.4214138
    %v2218 = vmul.f32 %v2217, %v2213
    %v2219 = vadd.f32 %v2218, -0.28449672
    %v2220 = vmul.f32 %v2219, %v2213
    %v2221 = vadd.f32 %v2220, 0.2548296
    %v2222 = vmul.f32 %v2221, %v2213
    %v2223 = vsub.f32 0.0, %v2209
    %v2224 = vmul.f32 %v2223, %v2209
    %v2225 = vmul.f32 %v2224, 1.442695
    %v2226 = vpow.pop %v2225
    %v2227 = vmul.f32 %v2222, %v2226
    %v2228 = vsub.f32 1.0, %v2227
    %vm2229 = vcmp.ge.f32.partialorder %v2208, 0.0
    %v2230 = vsub.f32 0.0, %v2228
    %v2231 = vsel %vm2229, %v2228, %v2230
    %v2232 = vadd.f32 %v2231, 1.0
    %v2233 = vmul.f32 %v2207, %v2232
    %v2234 = vpack.c.bf16 %v2233, %v2233
    %s2235 = scalar_lea.vmem [#allocation5], 128
    %v2236 = vld [vmem:[%s2235] sm:$0xf]
    %v2237 = vld [vmem:[%s2235 + $0x4] sm:$0xf]
    %v2238 = vld [vmem:[%s2235 + $0x8] sm:$0xf]
    %v2239 = vld [vmem:[%s2235 + $0xc] sm:$0xf]
    %v2240 = vld [vmem:[%s2235 + $0x10] sm:$0xf]
    %v2241 = vld [vmem:[%s2235 + $0x14] sm:$0xf]
    %v2242 = vld [vmem:[%s2235 + $0x18] sm:$0xf]
    %v2243 = vld [vmem:[%s2235 + $0x1c] sm:$0xf]
    %v2244 = vld [vmem:[%s2235 + $0x20] sm:$0xf]
    %v2245 = vld [vmem:[%s2235 + $0x24] sm:$0xf]
    %v2246 = vld [vmem:[%s2235 + $0x28] sm:$0xf]
    %v2247 = vld [vmem:[%s2235 + $0x2c] sm:$0xf]
    %v2248 = vld [vmem:[%s2235 + $0x30] sm:$0xf]
    %v2249 = vld [vmem:[%s2235 + $0x34] sm:$0xf]
    %v2250 = vld [vmem:[%s2235 + $0x38] sm:$0xf]
    %v2251 = vld [vmem:[%s2235 + $0x3c] sm:$0xf]
    %s2252 = scalar_lea.vmem %s7, 2
    %v2253 = vld [vmem:[%s2252] sm:$0x1]
    %v2255 = vlaneseq
    %v2256 = vshrl.u32 %v2255, 7
    %v2257 = vsub.s32 0, %v2256
    %v2258 = vrot.slane %v2253, %v2257
    %v2276 = vunpack.c.l.b16 %v2236
    %v2277 = vunpack.c.l.b16 %v2237
    %v2278 = vunpack.c.l.b16 %v2238
    %v2279 = vunpack.c.l.b16 %v2239
    %v2280 = vunpack.c.l.b16 %v2240
    %v2281 = vunpack.c.l.b16 %v2241
    %v2282 = vunpack.c.l.b16 %v2242
    %v2283 = vunpack.c.l.b16 %v2243
    %v2284 = vunpack.c.l.b16 %v2244
    %v2285 = vunpack.c.l.b16 %v2245
    %v2286 = vunpack.c.l.b16 %v2246
    %v2287 = vunpack.c.l.b16 %v2247
    %v2288 = vunpack.c.l.b16 %v2248
    %v2289 = vunpack.c.l.b16 %v2249
    %v2290 = vunpack.c.l.b16 %v2250
    %v2291 = vunpack.c.l.b16 %v2251
    %v2292 = vpack.c.b16 %v2277, %v2276
    %v2293 = vpack.c.b16 %v2279, %v2278
    %v2294 = vpack.c.b16 %v2281, %v2280
    %v2295 = vpack.c.b16 %v2283, %v2282
    %v2296 = vpack.c.b16 %v2285, %v2284
    %v2297 = vpack.c.b16 %v2287, %v2286
    %v2298 = vpack.c.b16 %v2289, %v2288
    %v2299 = vpack.c.b16 %v2291, %v2290
    %2308 = vmatprep.subr.bf16.mxu0 0
    %2309 = vmatpush1.bf16.msra.mxu0 %v2292
    %2310 = vmatprep.subr.bf16.mxu0 0
    %2311 = vmatpush1.bf16.msra.mxu0 %v2293
    %2312 = vmatprep.subr.bf16.mxu0 0
    %2313 = vmatpush1.bf16.msra.mxu0 %v2294
    %2314 = vmatprep.subr.bf16.mxu0 0
    %2315 = vmatpush1.bf16.msra.mxu0 %v2295
    %2316 = vmatprep.subr.bf16.mxu0 0
    %2317 = vmatpush1.bf16.msra.mxu0 %v2296
    %2318 = vmatprep.subr.bf16.mxu0 0
    %2319 = vmatpush1.bf16.msra.mxu0 %v2297
    %2320 = vmatprep.subr.bf16.mxu0 0
    %2321 = vmatpush1.bf16.msra.mxu0 %v2298
    %2322 = vmatprep.subr.bf16.mxu0 0
    %2323 = vmatpush1.bf16.msra.mxu0 %v2299
    %2324 = vmatprep.subr.bf16.mxu0 0
    %2325 = vmatpush1.bf16.msra.mxu0 0
    %2326 = vmatprep.subr.bf16.mxu0 0
    %2327 = vmatpush1.bf16.msra.mxu0 0
    %2328 = vmatprep.subr.bf16.mxu0 0
    %2329 = vmatpush1.bf16.msra.mxu0 0
    %2330 = vmatprep.subr.bf16.mxu0 0
    %2331 = vmatpush1.bf16.msra.mxu0 0
    %2332 = vmatprep.subr.bf16.mxu0 0
    %2333 = vmatpush1.bf16.msra.mxu0 0
    %2334 = vmatprep.subr.bf16.mxu0 0
    %2335 = vmatpush1.bf16.msra.mxu0 0
    %2336 = vmatprep.subr.bf16.mxu0 0
    %2337 = vmatpush1.bf16.msra.mxu0 0
    %2338 = vmatprep.subr.bf16.mxu0 0
    %2339 = vmatpush1.bf16.msra.mxu0 0
    %2340 = vmatprep.mubr.bf16.mxu0 0
    %2341 = vmatmul.mubr.bf16.gmra.mrb[0].mxu0 %v2234
    %v2342 = vpop.f32.mrb[0].mxu0
    %v2343 = vadd.f32 %v2258, %v2342
    %v2344 = vpop.f32.mrb[0].mxu0
    %v2345 = vpop.f32.mrb[0].mxu0
    %v2346 = vpop.f32.mrb[0].mxu0
    %2347 = vdwg.mxu0
    %v2348 = vmul.f32 %v2343, 0.5
    %v2349 = vmul.f32 %v2343, 0.70710677
    %v2350 = vand.u32 2147483647, %v2349
    %v2351 = vmul.f32 %v2350, 0.3275911
    %v2352 = vadd.f32 %v2351, 1.0
    %v2353 = vrcp.pop %v2352
    %v2354 = vmul.f32 1.0, %v2353
    %v2355 = vmul.f32 %v2354, 1.0614054
    %v2356 = vadd.f32 %v2355, -1.4531521
    %v2357 = vmul.f32 %v2356, %v2354
    %v2358 = vadd.f32 %v2357, 1.4214138
    %v2359 = vmul.f32 %v2358, %v2354
    %v2360 = vadd.f32 %v2359, -0.28449672
    %v2361 = vmul.f32 %v2360, %v2354
    %v2362 = vadd.f32 %v2361, 0.2548296
    %v2363 = vmul.f32 %v2362, %v2354
    %v2364 = vsub.f32 0.0, %v2350
    %v2365 = vmul.f32 %v2364, %v2350
    %v2366 = vmul.f32 %v2365, 1.442695
    %v2367 = vpow.pop %v2366
    %v2368 = vmul.f32 %v2363, %v2367
    %v2369 = vsub.f32 1.0, %v2368
    %vm2370 = vcmp.ge.f32.partialorder %v2349, 0.0
    %v2371 = vsub.f32 0.0, %v2369
    %v2372 = vsel %vm2370, %v2369, %v2371
    %v2373 = vadd.f32 %v2372, 1.0
    %v2374 = vmul.f32 %v2348, %v2373
    %v2375 = vpack.c.bf16 %v2374, %v2374
    %v2376 = vld [vmem:[%s8] sm:$0xf]
    %v2377 = vld [vmem:[%s8 + $0x4] sm:$0xf]
    %v2378 = vld [vmem:[%s8 + $0x8] sm:$0xf]
    %v2379 = vld [vmem:[%s8 + $0xc] sm:$0xf]
    %v2380 = vld [vmem:[%s8 + $0x10] sm:$0xf]
    %v2381 = vld [vmem:[%s8 + $0x14] sm:$0xf]
    %v2382 = vld [vmem:[%s8 + $0x18] sm:$0xf]
    %v2383 = vld [vmem:[%s8 + $0x1c] sm:$0xf]
    %v2384 = vld [vmem:[%s8 + $0x20] sm:$0xf]
    %v2385 = vld [vmem:[%s8 + $0x24] sm:$0xf]
    %v2386 = vld [vmem:[%s8 + $0x28] sm:$0xf]
    %v2387 = vld [vmem:[%s8 + $0x2c] sm:$0xf]
    %v2388 = vld [vmem:[%s8 + $0x30] sm:$0xf]
    %v2389 = vld [vmem:[%s8 + $0x34] sm:$0xf]
    %v2390 = vld [vmem:[%s8 + $0x38] sm:$0xf]
    %v2391 = vld [vmem:[%s8 + $0x3c] sm:$0xf]
    %v2392 = vld [vmem:[%s9] sm:$0x1]
    %v2394 = vlaneseq
    %v2395 = vshrl.u32 %v2394, 7
    %v2396 = vsub.s32 0, %v2395
    %v2397 = vrot.slane %v2392, %v2396
    %v2415 = vunpack.c.l.b16 %v2376
    %v2416 = vunpack.c.l.b16 %v2377
    %v2417 = vunpack.c.l.b16 %v2378
    %v2418 = vunpack.c.l.b16 %v2379
    %v2419 = vunpack.c.l.b16 %v2380
    %v2420 = vunpack.c.l.b16 %v2381
    %v2421 = vunpack.c.l.b16 %v2382
    %v2422 = vunpack.c.l.b16 %v2383
    %v2423 = vunpack.c.l.b16 %v2384
    %v2424 = vunpack.c.l.b16 %v2385
    %v2425 = vunpack.c.l.b16 %v2386
    %v2426 = vunpack.c.l.b16 %v2387
    %v2427 = vunpack.c.l.b16 %v2388
    %v2428 = vunpack.c.l.b16 %v2389
    %v2429 = vunpack.c.l.b16 %v2390
    %v2430 = vunpack.c.l.b16 %v2391
    %v2431 = vpack.c.b16 %v2416, %v2415
    %v2432 = vpack.c.b16 %v2418, %v2417
    %v2433 = vpack.c.b16 %v2420, %v2419
    %v2434 = vpack.c.b16 %v2422, %v2421
    %v2435 = vpack.c.b16 %v2424, %v2423
    %v2436 = vpack.c.b16 %v2426, %v2425
    %v2437 = vpack.c.b16 %v2428, %v2427
    %v2438 = vpack.c.b16 %v2430, %v2429
    %2447 = vmatprep.subr.bf16.mxu0 0
    %2448 = vmatpush1.bf16.msra.mxu0 %v2431
    %2449 = vmatprep.subr.bf16.mxu0 0
    %2450 = vmatpush1.bf16.msra.mxu0 %v2432
    %2451 = vmatprep.subr.bf16.mxu0 0
    %2452 = vmatpush1.bf16.msra.mxu0 %v2433
    %2453 = vmatprep.subr.bf16.mxu0 0
    %2454 = vmatpush1.bf16.msra.mxu0 %v2434
    %2455 = vmatprep.subr.bf16.mxu0 0
    %2456 = vmatpush1.bf16.msra.mxu0 %v2435
    %2457 = vmatprep.subr.bf16.mxu0 0
    %2458 = vmatpush1.bf16.msra.mxu0 %v2436
    %2459 = vmatprep.subr.bf16.mxu0 0
    %2460 = vmatpush1.bf16.msra.mxu0 %v2437
    %2461 = vmatprep.subr.bf16.mxu0 0
    %2462 = vmatpush1.bf16.msra.mxu0 %v2438
    %2463 = vmatprep.subr.bf16.mxu0 0
    %2464 = vmatpush1.bf16.msra.mxu0 0
    %2465 = vmatprep.subr.bf16.mxu0 0
    %2466 = vmatpush1.bf16.msra.mxu0 0
    %2467 = vmatprep.subr.bf16.mxu0 0
    %2468 = vmatpush1.bf16.msra.mxu0 0
    %2469 = vmatprep.subr.bf16.mxu0 0
    %2470 = vmatpush1.bf16.msra.mxu0 0
    %2471 = vmatprep.subr.bf16.mxu0 0
    %2472 = vmatpush1.bf16.msra.mxu0 0
    %2473 = vmatprep.subr.bf16.mxu0 0
    %2474 = vmatpush1.bf16.msra.mxu0 0
    %2475 = vmatprep.subr.bf16.mxu0 0
    %2476 = vmatpush1.bf16.msra.mxu0 0
    %2477 = vmatprep.subr.bf16.mxu0 0
    %2478 = vmatpush1.bf16.msra.mxu0 0
    %2479 = vmatprep.mubr.bf16.mxu0 0
    %2480 = vmatmul.mubr.bf16.gmra.mrb[0].mxu0 %v2375
    %v2481 = vpop.f32.mrb[0].mxu0
    %v2482 = vadd.f32 %v2397, %v2481
    %v2483 = vpop.f32.mrb[0].mxu0
    %v2484 = vpop.f32.mrb[0].mxu0
    %v2485 = vpop.f32.mrb[0].mxu0
    %2486 = vdwg.mxu0
    %2487 = vst [vmem:[#allocation7] sm:$0xff] %v2482
    // Predicated region
    $region50: #{tpu_custom_call.1} parent=1 // pred_check
      _
    $region51: #{tpu_custom_call.1} parent=1 // pred_check_branch
      %2489 = sbr.rel (0) target = $region53
    $region52: #{tpu_custom_call.1} parent=1 // pred_region
      %s2491 = ssub.s32 128, 128
      %2492 = vsyncadd [#allocation4], %s2491
      %s2494 = sshll.u32 [#allocation7], 4
      %s2495 = int_to_ptr.vmem [resolvable:$true] %s2494
      %2497 = dma.vmem_to_hbm [thread:$0]  %s2495, 128, %s10, [#allocation4]
    $region53: #{tpu_custom_call.1} parent=1 // pred_fallthru
      _
    // Predicated region
    $region54: #{tpu_custom_call.1} parent=1 // pred_check
      _
    $region55: #{tpu_custom_call.1} parent=1 // pred_check_branch
      %2499 = sbr.rel (0) target = $region57
    $region56: #{tpu_custom_call.1} parent=1 // pred_region
      %2500 = dma.done [#allocation4], 128
    $region57: #{tpu_custom_call.1} parent=1 // pred_fallthru
      _
    %2501 = vsyncpa [#allocation3], 1
    %2502 = vsyncpa [#allocation6], 1
    %2503 = vsyncpa [#allocation4], 1

</llo_original>
